<compile_context>
chip_gen: v7x
topology: tpu7x:2x2x1
jax: 0.10.0
libtpu: 0.0.40
codegen_flags: <defaults>
</compile_context>

<pallas_src>
import math

import jax
import jax.numpy as jnp
import numpy as np
from jax.experimental import pallas as pl
from jax.experimental.pallas import tpu as pltpu

# ---------------- model sizes (small, consistent with the module's forward) -------------
B = 8          # batch (sublane-full)
T = 8          # seq length
D = 32         # CNN_embed_dim (RNN input size); equals H so the packed LSTM slab is uniform
H = 32         # h_RNN (LSTM hidden size)
NL = 3         # h_RNN_layers
FC = 16        # h_FC_dim
DROP_P = 0.3   # dropout prob (inference => identity)


def decoder_rnn_kernel(x_ref, lstm_ref, fc_ref, out_ref):
    """x_ref:    (T*B, D)  f32, time-major flattened input
       lstm_ref: (NL, D+H+1, 4H) bf16, per-layer [W_ih; W_hh; b_ih+b_hh] slabs
                 (g-gate columns pre-scaled by 2 for the single-sigmoid trick)
       fc_ref:   (H+3, FC) f32, rows = [fc1_w; fc1_b; fc2_w^T; fc2_b broadcast]
       out_ref:  (B, 1) f32
    """
    tb, d_in = x_ref.shape
    nl, _, g4 = lstm_ref.shape
    h_dim = g4 // 4
    b_dim = out_ref.shape[0]
    t_dim = tb // b_dim

    # ---- hoisted parameter loads (once; static sub-views of the packed slabs) ----------
    w_ih0 = lstm_ref[0, 0:d_in, :]                                            # (D, 4H) bf16
    w_hh0 = lstm_ref[0, d_in:d_in + h_dim, :]                                 # (H, 4H) bf16
    b0 = lstm_ref[0, d_in + h_dim:d_in + h_dim + 1, :].astype(jnp.float32)    # (1, 4H)
    w_cat = [None]
    bias = [None]
    for l in range(1, nl):
        w_cat.append(lstm_ref[l, 0:2 * h_dim, :])                             # (2H, 4H) bf16
        bias.append(lstm_ref[l, 2 * h_dim:2 * h_dim + 1, :].astype(jnp.float32))

    # ---- layer-0 input projection hoisted out of the recurrence (bias folded in) -------
    proj0 = jnp.dot(x_ref[...].astype(jnp.bfloat16), w_ih0,
                    preferred_element_type=jnp.float32) + b0                  # (T*B, 4H) f32

    def cell(gates, c):
        # One full-vreg sigmoid; g-gate recovered via tanh(x) = 2*sigmoid(2x) - 1
        # (the 2x is pre-folded into the packed weights/bias).
        sig = jax.nn.sigmoid(gates)
        i = sig[:, 0:h_dim]
        f = sig[:, h_dim:2 * h_dim]
        g = 2.0 * sig[:, 2 * h_dim:3 * h_dim] - 1.0
        o = sig[:, 3 * h_dim:4 * h_dim]
        c_new = f * c + i * g
        h_new = o * jnp.tanh(c_new)
        return h_new, c_new

    # ---- wavefront over (layer, time): layer l runs step t at wave t + l ----------------
    zeros = jnp.zeros((b_dim, h_dim), jnp.float32)
    h = [zeros] * nl
    c = [zeros] * nl
    for wave in range(t_dim + nl - 1):          # statically unrolled: T + NL - 1 = 10 waves
        h_prev = list(h)                        # snapshot: reads see end-of-previous-wave state
        for l in range(nl):
            t = wave - l
            if 0 <= t < t_dim:
                if l == 0:
                    gates = proj0[t * b_dim:(t + 1) * b_dim, :] + jnp.dot(
                        h_prev[0].astype(jnp.bfloat16), w_hh0,
                        preferred_element_type=jnp.float32)
                else:
                    hcat = jnp.concatenate([h_prev[l - 1], h_prev[l]], axis=1)   # (B, 2H)
                    gates = jnp.dot(hcat.astype(jnp.bfloat16), w_cat[l],
                                    preferred_element_type=jnp.float32) + bias[l]
                h[l], c[l] = cell(gates, c[l])

    # ---- head: fc1(last step of top layer) -> ReLU -> dropout(identity at inference)
    #            -> fc2 as VPU mul + lane reduce -> sigmoid
    fc1_w = fc_ref[0:h_dim, :]
    fc1_b = fc_ref[h_dim:h_dim + 1, :]
    fc2_w = fc_ref[h_dim + 1:h_dim + 2, :]
    fc2_b = fc_ref[h_dim + 2:h_dim + 3, 0:1]
    y = jnp.dot(h[nl - 1].astype(jnp.bfloat16), fc1_w.astype(jnp.bfloat16),
                preferred_element_type=jnp.float32) + fc1_b
    y = jnp.maximum(y, 0.0)
    # TODO(synk): dropout is identity here (inference semantics, F.dropout(training=False)).
    z = jnp.sum(y * fc2_w, axis=-1, keepdims=True) + fc2_b
    out_ref[...] = jax.nn.sigmoid(z)


def pack_params(params):
    """Pack the 14 PyTorch-style parameter arrays into 2 slabs (see kernel docstring)."""
    gate_scale = jnp.ones((1, 4 * H), jnp.float32).at[:, 2 * H:3 * H].set(2.0)

    def layer_slab(w_ih, w_hh, b):
        # [W_ih; W_hh; b] along axis 0, g-gate columns pre-scaled 2x, cast once to bf16.
        return (jnp.concatenate([w_ih, w_hh, b], axis=0) * gate_scale).astype(jnp.bfloat16)

    assert D == H, "packed LSTM slab layout assumes equal per-layer row counts"
    lstm_slab = jnp.stack([
        layer_slab(params["w_ih0"], params["w_hh0"], params["b0"]),
        layer_slab(params["w_ih1"], params["w_hh1"], params["b1"]),
        layer_slab(params["w_ih2"], params["w_hh2"], params["b2"]),
    ], axis=0)                                                     # (NL, D+H+1, 4H) bf16

    fc_slab = jnp.concatenate([
        params["fc1_w"],                                           # (H, FC)
        params["fc1_b"],                                           # (1, FC)
        params["fc2_w"].T,                                         # (1, FC)
        jnp.broadcast_to(params["fc2_b"], (1, FC)),                # (1, FC)
    ], axis=0)                                                     # (H+3, FC) f32
    return lstm_slab, fc_slab


def decoder_rnn(x, params):
    b, t, d = x.shape
    # Time-major flatten so each timestep's batch block is a contiguous, aligned row slab.
    x2d = jnp.transpose(x, (1, 0, 2)).reshape(t * b, d)
    lstm_slab, fc_slab = pack_params(params)
    vmem = lambda: pl.BlockSpec(memory_space=pltpu.MemorySpace.VMEM)
    return pl.pallas_call(
        decoder_rnn_kernel,
        out_shape=jax.ShapeDtypeStruct((b, 1), jnp.float32),
        in_specs=[vmem(), vmem(), vmem()],
        out_specs=vmem(),
        # ~60 KB resident: no grid, pipelining, or vmem_limit override needed on v5e/v6e/v7x.
        # TODO(synk): at real batch sizes add a leading "parallel" batch grid axis so work
        # shards across v7x's two TensorCores.
        compiler_params=pltpu.CompilerParams(),
    )(x2d, lstm_slab, fc_slab)


def init_params(key):
    """Deterministic init mirroring PyTorch defaults (U(-1/sqrt(H), 1/sqrt(H)) for LSTM)."""
    ks = jax.random.split(key, 16)
    bound = 1.0 / math.sqrt(H)

    def u(k, shape, b):
        return jax.random.uniform(k, shape, jnp.float32, -b, b)

    p = {}
    # LSTM layer 0 (input dim D), layers 1-2 (input dim H). Weights stored transposed: (in, 4H).
    p["w_ih0"] = u(ks[0], (D, 4 * H), bound)
    p["w_hh0"] = u(ks[1], (H, 4 * H), bound)
    p["b0"] = u(ks[2], (1, 4 * H), bound) + u(ks[3], (1, 4 * H), bound)   # b_ih + b_hh
    p["w_ih1"] = u(ks[4], (H, 4 * H), bound)
    p["w_hh1"] = u(ks[5], (H, 4 * H), bound)
    p["b1"] = u(ks[6], (1, 4 * H), bound) + u(ks[7], (1, 4 * H), bound)
    p["w_ih2"] = u(ks[8], (H, 4 * H), bound)
    p["w_hh2"] = u(ks[9], (H, 4 * H), bound)
    p["b2"] = u(ks[10], (1, 4 * H), bound) + u(ks[11], (1, 4 * H), bound)
    # fc1: (H -> FC), fc2: (FC -> 1); PyTorch Linear init bound = 1/sqrt(fan_in)
    bound_fc1 = 1.0 / math.sqrt(H)
    bound_fc2 = 1.0 / math.sqrt(FC)
    p["fc1_w"] = u(ks[12], (H, FC), bound_fc1)
    p["fc1_b"] = u(ks[13], (1, FC), bound_fc1)
    p["fc2_w"] = u(ks[14], (FC, 1), bound_fc2)
    p["fc2_b"] = u(ks[15], (1, 1), bound_fc2)
    return p


def reference_forward(x, p):
    """Pure-JAX f32 reference replicating nn.LSTM(batch_first) + fc head (eval mode)."""
    def run_layer(seq, w_ih, w_hh, b):
        h = jnp.zeros((seq.shape[0], H), jnp.float32)
        c = jnp.zeros((seq.shape[0], H), jnp.float32)
        outs = []
        for t in range(seq.shape[1]):
            g = seq[:, t, :] @ w_ih + h @ w_hh + b
            i = jax.nn.sigmoid(g[:, 0:H])
            f = jax.nn.sigmoid(g[:, H:2 * H])
            gg = jnp.tanh(g[:, 2 * H:3 * H])
            o = jax.nn.sigmoid(g[:, 3 * H:4 * H])
            c = f * c + i * gg
            h = o * jnp.tanh(c)
            outs.append(h)
        return jnp.stack(outs, axis=1)

    seq = run_layer(x, p["w_ih0"], p["w_hh0"], p["b0"])
    seq = run_layer(seq, p["w_ih1"], p["w_hh1"], p["b1"])
    seq = run_layer(seq, p["w_ih2"], p["w_hh2"], p["b2"])
    y = jnp.maximum(seq[:, -1, :] @ p["fc1_w"] + p["fc1_b"], 0.0)
    return jax.nn.sigmoid(y @ p["fc2_w"] + p["fc2_b"])


if __name__ == "__main__":
    key = jax.random.PRNGKey(0)
    kx, kp = jax.random.split(key)
    x = jax.random.normal(kx, (B, T, D), jnp.float32)
    params = init_params(kp)

    out = jax.block_until_ready(decoder_rnn(x, params))
    ref = jax.block_until_ready(reference_forward(x, params))

    assert out.shape == (B, 1), out.shape
    # Tolerance relaxed vs. the pure-f32 version: MXU operands are bf16 (f32 accumulate/state).
    np.testing.assert_allclose(np.asarray(out), np.asarray(ref), rtol=2e-2, atol=2e-2)
    print("KERNEL_OK")
</pallas_src>

<mosaic_0001>
module attributes {stable_mosaic.version = 11 : i64} {
  func.func @decoder_rnn_kernel(%arg0: memref<64x32xf32, #tpu.memory_space<vmem>>, %arg1: memref<3x65x128xbf16, #tpu.memory_space<vmem>>, %arg2: memref<35x16xf32, #tpu.memory_space<vmem>>, %arg3: memref<8x1xf32, #tpu.memory_space<vmem>>) attributes {dimension_semantics = [], scalar_prefetch = 0 : i64, scratch_operands = 0 : i64, tpu.core_type = #tpu.core_type<tc>} {
    %c0 = arith.constant 0 : index
    %c0_0 = arith.constant 0 : index
    %c0_1 = arith.constant 0 : index
    %0 = vector.load %arg1[%c0, %c0_0, %c0_1] : memref<3x65x128xbf16, #tpu.memory_space<vmem>>, vector<1x32x128xbf16>
    %1 = vector.shape_cast %0 : vector<1x32x128xbf16> to vector<32x128xbf16>
    %c0_2 = arith.constant 0 : index
    %c32 = arith.constant 32 : index
    %c0_3 = arith.constant 0 : index
    %2 = vector.load %arg1[%c0_2, %c32, %c0_3] : memref<3x65x128xbf16, #tpu.memory_space<vmem>>, vector<1x32x128xbf16>
    %3 = vector.shape_cast %2 : vector<1x32x128xbf16> to vector<32x128xbf16>
    %c0_4 = arith.constant 0 : index
    %c64 = arith.constant 64 : index
    %c0_5 = arith.constant 0 : index
    %4 = vector.load %arg1[%c0_4, %c64, %c0_5] : memref<3x65x128xbf16, #tpu.memory_space<vmem>>, vector<1x1x128xbf16>
    %5 = vector.shape_cast %4 : vector<1x1x128xbf16> to vector<1x128xbf16>
    %6 = arith.extf %5 : vector<1x128xbf16> to vector<1x128xf32>
    %c1 = arith.constant 1 : index
    %c0_6 = arith.constant 0 : index
    %c0_7 = arith.constant 0 : index
    %7 = vector.load %arg1[%c1, %c0_6, %c0_7] : memref<3x65x128xbf16, #tpu.memory_space<vmem>>, vector<1x64x128xbf16>
    %8 = vector.shape_cast %7 : vector<1x64x128xbf16> to vector<64x128xbf16>
    %c1_8 = arith.constant 1 : index
    %c64_9 = arith.constant 64 : index
    %c0_10 = arith.constant 0 : index
    %9 = vector.load %arg1[%c1_8, %c64_9, %c0_10] : memref<3x65x128xbf16, #tpu.memory_space<vmem>>, vector<1x1x128xbf16>
    %10 = vector.shape_cast %9 : vector<1x1x128xbf16> to vector<1x128xbf16>
    %11 = arith.extf %10 : vector<1x128xbf16> to vector<1x128xf32>
    %c2 = arith.constant 2 : index
    %c0_11 = arith.constant 0 : index
    %c0_12 = arith.constant 0 : index
    %12 = vector.load %arg1[%c2, %c0_11, %c0_12] : memref<3x65x128xbf16, #tpu.memory_space<vmem>>, vector<1x64x128xbf16>
    %13 = vector.shape_cast %12 : vector<1x64x128xbf16> to vector<64x128xbf16>
    %c2_13 = arith.constant 2 : index
    %c64_14 = arith.constant 64 : index
    %c0_15 = arith.constant 0 : index
    %14 = vector.load %arg1[%c2_13, %c64_14, %c0_15] : memref<3x65x128xbf16, #tpu.memory_space<vmem>>, vector<1x1x128xbf16>
    %15 = vector.shape_cast %14 : vector<1x1x128xbf16> to vector<1x128xbf16>
    %16 = arith.extf %15 : vector<1x128xbf16> to vector<1x128xf32>
    %c0_16 = arith.constant 0 : index
    %c0_17 = arith.constant 0 : index
    %17 = vector.load %arg0[%c0_16, %c0_17] : memref<64x32xf32, #tpu.memory_space<vmem>>, vector<64x32xf32>
    %18 = arith.truncf %17 : vector<64x32xf32> to vector<64x32xbf16>
    %cst = arith.constant dense<0.000000e+00> : vector<64x128xf32>
    %19 = tpu.matmul %18, %1, %cst {dimension_numbers = #tpu.dot_dimension_numbers<[1], [0], [0], [1], [0, 0, 1, 1], [], []>} : vector<64x32xbf16>, vector<32x128xbf16>, vector<64x128xf32> -> vector<64x128xf32>
    %20 = vector.broadcast %6 : vector<1x128xf32> to vector<64x128xf32>
    %21 = arith.addf %19, %20 : vector<64x128xf32>
    %cst_18 = arith.constant 0.000000e+00 : f32
    %22 = vector.broadcast %cst_18 : f32 to vector<8x32xf32>
    %23 = vector.extract_strided_slice %21 {offsets = [0, 0], sizes = [8, 128], strides = [1, 1]} : vector<64x128xf32> to vector<8x128xf32>
    %24 = arith.truncf %22 : vector<8x32xf32> to vector<8x32xbf16>
    %cst_19 = arith.constant dense<0.000000e+00> : vector<8x128xf32>
    %25 = tpu.matmul %24, %3, %cst_19 {dimension_numbers = #tpu.dot_dimension_numbers<[1], [0], [0], [1], [0, 0, 1, 1], [], []>} : vector<8x32xbf16>, vector<32x128xbf16>, vector<8x128xf32> -> vector<8x128xf32>
    %26 = arith.addf %23, %25 : vector<8x128xf32>
    %27 = arith.negf %26 : vector<8x128xf32>
    %28 = math.exp %27 : vector<8x128xf32>
    %cst_20 = arith.constant 1.000000e+00 : f32
    %29 = vector.broadcast %cst_20 : f32 to vector<8x128xf32>
    %30 = arith.addf %29, %28 : vector<8x128xf32>
    %31 = arith.divf %29, %30 : vector<8x128xf32>
    %32 = vector.extract_strided_slice %31 {offsets = [0, 0], sizes = [8, 32], strides = [1, 1]} : vector<8x128xf32> to vector<8x32xf32>
    %33 = vector.extract_strided_slice %31 {offsets = [0, 32], sizes = [8, 32], strides = [1, 1]} : vector<8x128xf32> to vector<8x32xf32>
    %34 = vector.extract_strided_slice %31 {offsets = [0, 64], sizes = [8, 32], strides = [1, 1]} : vector<8x128xf32> to vector<8x32xf32>
    %cst_21 = arith.constant 2.000000e+00 : f32
    %35 = vector.broadcast %cst_21 : f32 to vector<8x32xf32>
    %36 = arith.mulf %35, %34 : vector<8x32xf32>
    %cst_22 = arith.constant 1.000000e+00 : f32
    %37 = vector.broadcast %cst_22 : f32 to vector<8x32xf32>
    %38 = arith.subf %36, %37 : vector<8x32xf32>
    %39 = vector.extract_strided_slice %31 {offsets = [0, 96], sizes = [8, 32], strides = [1, 1]} : vector<8x128xf32> to vector<8x32xf32>
    %40 = arith.mulf %33, %22 : vector<8x32xf32>
    %41 = arith.mulf %32, %38 : vector<8x32xf32>
    %42 = arith.addf %40, %41 : vector<8x32xf32>
    %43 = math.tanh %42 : vector<8x32xf32>
    %44 = arith.mulf %39, %43 : vector<8x32xf32>
    %45 = vector.extract_strided_slice %21 {offsets = [8, 0], sizes = [8, 128], strides = [1, 1]} : vector<64x128xf32> to vector<8x128xf32>
    %46 = arith.truncf %44 : vector<8x32xf32> to vector<8x32xbf16>
    %cst_23 = arith.constant dense<0.000000e+00> : vector<8x128xf32>
    %47 = tpu.matmul %46, %3, %cst_23 {dimension_numbers = #tpu.dot_dimension_numbers<[1], [0], [0], [1], [0, 0, 1, 1], [], []>} : vector<8x32xbf16>, vector<32x128xbf16>, vector<8x128xf32> -> vector<8x128xf32>
    %48 = arith.addf %45, %47 : vector<8x128xf32>
    %49 = arith.negf %48 : vector<8x128xf32>
    %50 = math.exp %49 : vector<8x128xf32>
    %cst_24 = arith.constant 1.000000e+00 : f32
    %51 = vector.broadcast %cst_24 : f32 to vector<8x128xf32>
    %52 = arith.addf %51, %50 : vector<8x128xf32>
    %53 = arith.divf %51, %52 : vector<8x128xf32>
    %54 = vector.extract_strided_slice %53 {offsets = [0, 0], sizes = [8, 32], strides = [1, 1]} : vector<8x128xf32> to vector<8x32xf32>
    %55 = vector.extract_strided_slice %53 {offsets = [0, 32], sizes = [8, 32], strides = [1, 1]} : vector<8x128xf32> to vector<8x32xf32>
    %56 = vector.extract_strided_slice %53 {offsets = [0, 64], sizes = [8, 32], strides = [1, 1]} : vector<8x128xf32> to vector<8x32xf32>
    %cst_25 = arith.constant 2.000000e+00 : f32
    %57 = vector.broadcast %cst_25 : f32 to vector<8x32xf32>
    %58 = arith.mulf %57, %56 : vector<8x32xf32>
    %cst_26 = arith.constant 1.000000e+00 : f32
    %59 = vector.broadcast %cst_26 : f32 to vector<8x32xf32>
    %60 = arith.subf %58, %59 : vector<8x32xf32>
    %61 = vector.extract_strided_slice %53 {offsets = [0, 96], sizes = [8, 32], strides = [1, 1]} : vector<8x128xf32> to vector<8x32xf32>
    %62 = arith.mulf %55, %42 : vector<8x32xf32>
    %63 = arith.mulf %54, %60 : vector<8x32xf32>
    %64 = arith.addf %62, %63 : vector<8x32xf32>
    %65 = math.tanh %64 : vector<8x32xf32>
    %66 = arith.mulf %61, %65 : vector<8x32xf32>
    %67 = tpu.concatenate %44, %22 in 1 : vector<8x32xf32>, vector<8x32xf32> -> vector<8x64xf32>
    %68 = arith.truncf %67 : vector<8x64xf32> to vector<8x64xbf16>
    %cst_27 = arith.constant dense<0.000000e+00> : vector<8x128xf32>
    %69 = tpu.matmul %68, %8, %cst_27 {dimension_numbers = #tpu.dot_dimension_numbers<[1], [0], [0], [1], [0, 0, 1, 1], [], []>} : vector<8x64xbf16>, vector<64x128xbf16>, vector<8x128xf32> -> vector<8x128xf32>
    %70 = vector.broadcast %11 : vector<1x128xf32> to vector<8x128xf32>
    %71 = arith.addf %69, %70 : vector<8x128xf32>
    %72 = arith.negf %71 : vector<8x128xf32>
    %73 = math.exp %72 : vector<8x128xf32>
    %cst_28 = arith.constant 1.000000e+00 : f32
    %74 = vector.broadcast %cst_28 : f32 to vector<8x128xf32>
    %75 = arith.addf %74, %73 : vector<8x128xf32>
    %76 = arith.divf %74, %75 : vector<8x128xf32>
    %77 = vector.extract_strided_slice %76 {offsets = [0, 0], sizes = [8, 32], strides = [1, 1]} : vector<8x128xf32> to vector<8x32xf32>
    %78 = vector.extract_strided_slice %76 {offsets = [0, 32], sizes = [8, 32], strides = [1, 1]} : vector<8x128xf32> to vector<8x32xf32>
    %79 = vector.extract_strided_slice %76 {offsets = [0, 64], sizes = [8, 32], strides = [1, 1]} : vector<8x128xf32> to vector<8x32xf32>
    %cst_29 = arith.constant 2.000000e+00 : f32
    %80 = vector.broadcast %cst_29 : f32 to vector<8x32xf32>
    %81 = arith.mulf %80, %79 : vector<8x32xf32>
    %cst_30 = arith.constant 1.000000e+00 : f32
    %82 = vector.broadcast %cst_30 : f32 to vector<8x32xf32>
    %83 = arith.subf %81, %82 : vector<8x32xf32>
    %84 = vector.extract_strided_slice %76 {offsets = [0, 96], sizes = [8, 32], strides = [1, 1]} : vector<8x128xf32> to vector<8x32xf32>
    %85 = arith.mulf %78, %22 : vector<8x32xf32>
    %86 = arith.mulf %77, %83 : vector<8x32xf32>
    %87 = arith.addf %85, %86 : vector<8x32xf32>
    %88 = math.tanh %87 : vector<8x32xf32>
    %89 = arith.mulf %84, %88 : vector<8x32xf32>
    %90 = vector.extract_strided_slice %21 {offsets = [16, 0], sizes = [8, 128], strides = [1, 1]} : vector<64x128xf32> to vector<8x128xf32>
    %91 = arith.truncf %66 : vector<8x32xf32> to vector<8x32xbf16>
    %cst_31 = arith.constant dense<0.000000e+00> : vector<8x128xf32>
    %92 = tpu.matmul %91, %3, %cst_31 {dimension_numbers = #tpu.dot_dimension_numbers<[1], [0], [0], [1], [0, 0, 1, 1], [], []>} : vector<8x32xbf16>, vector<32x128xbf16>, vector<8x128xf32> -> vector<8x128xf32>
    %93 = arith.addf %90, %92 : vector<8x128xf32>
    %94 = arith.negf %93 : vector<8x128xf32>
    %95 = math.exp %94 : vector<8x128xf32>
    %cst_32 = arith.constant 1.000000e+00 : f32
    %96 = vector.broadcast %cst_32 : f32 to vector<8x128xf32>
    %97 = arith.addf %96, %95 : vector<8x128xf32>
    %98 = arith.divf %96, %97 : vector<8x128xf32>
    %99 = vector.extract_strided_slice %98 {offsets = [0, 0], sizes = [8, 32], strides = [1, 1]} : vector<8x128xf32> to vector<8x32xf32>
    %100 = vector.extract_strided_slice %98 {offsets = [0, 32], sizes = [8, 32], strides = [1, 1]} : vector<8x128xf32> to vector<8x32xf32>
    %101 = vector.extract_strided_slice %98 {offsets = [0, 64], sizes = [8, 32], strides = [1, 1]} : vector<8x128xf32> to vector<8x32xf32>
    %cst_33 = arith.constant 2.000000e+00 : f32
    %102 = vector.broadcast %cst_33 : f32 to vector<8x32xf32>
    %103 = arith.mulf %102, %101 : vector<8x32xf32>
    %cst_34 = arith.constant 1.000000e+00 : f32
    %104 = vector.broadcast %cst_34 : f32 to vector<8x32xf32>
    %105 = arith.subf %103, %104 : vector<8x32xf32>
    %106 = vector.extract_strided_slice %98 {offsets = [0, 96], sizes = [8, 32], strides = [1, 1]} : vector<8x128xf32> to vector<8x32xf32>
    %107 = arith.mulf %100, %64 : vector<8x32xf32>
    %108 = arith.mulf %99, %105 : vector<8x32xf32>
    %109 = arith.addf %107, %108 : vector<8x32xf32>
    %110 = math.tanh %109 : vector<8x32xf32>
    %111 = arith.mulf %106, %110 : vector<8x32xf32>
    %112 = tpu.concatenate %66, %89 in 1 : vector<8x32xf32>, vector<8x32xf32> -> vector<8x64xf32>
    %113 = arith.truncf %112 : vector<8x64xf32> to vector<8x64xbf16>
    %cst_35 = arith.constant dense<0.000000e+00> : vector<8x128xf32>
    %114 = tpu.matmul %113, %8, %cst_35 {dimension_numbers = #tpu.dot_dimension_numbers<[1], [0], [0], [1], [0, 0, 1, 1], [], []>} : vector<8x64xbf16>, vector<64x128xbf16>, vector<8x128xf32> -> vector<8x128xf32>
    %115 = vector.broadcast %11 : vector<1x128xf32> to vector<8x128xf32>
    %116 = arith.addf %114, %115 : vector<8x128xf32>
    %117 = arith.negf %116 : vector<8x128xf32>
    %118 = math.exp %117 : vector<8x128xf32>
    %cst_36 = arith.constant 1.000000e+00 : f32
    %119 = vector.broadcast %cst_36 : f32 to vector<8x128xf32>
    %120 = arith.addf %119, %118 : vector<8x128xf32>
    %121 = arith.divf %119, %120 : vector<8x128xf32>
    %122 = vector.extract_strided_slice %121 {offsets = [0, 0], sizes = [8, 32], strides = [1, 1]} : vector<8x128xf32> to vector<8x32xf32>
    %123 = vector.extract_strided_slice %121 {offsets = [0, 32], sizes = [8, 32], strides = [1, 1]} : vector<8x128xf32> to vector<8x32xf32>
    %124 = vector.extract_strided_slice %121 {offsets = [0, 64], sizes = [8, 32], strides = [1, 1]} : vector<8x128xf32> to vector<8x32xf32>
    %cst_37 = arith.constant 2.000000e+00 : f32
    %125 = vector.broadcast %cst_37 : f32 to vector<8x32xf32>
    %126 = arith.mulf %125, %124 : vector<8x32xf32>
    %cst_38 = arith.constant 1.000000e+00 : f32
    %127 = vector.broadcast %cst_38 : f32 to vector<8x32xf32>
    %128 = arith.subf %126, %127 : vector<8x32xf32>
    %129 = vector.extract_strided_slice %121 {offsets = [0, 96], sizes = [8, 32], strides = [1, 1]} : vector<8x128xf32> to vector<8x32xf32>
    %130 = arith.mulf %123, %87 : vector<8x32xf32>
    %131 = arith.mulf %122, %128 : vector<8x32xf32>
    %132 = arith.addf %130, %131 : vector<8x32xf32>
    %133 = math.tanh %132 : vector<8x32xf32>
    %134 = arith.mulf %129, %133 : vector<8x32xf32>
    %135 = tpu.concatenate %89, %22 in 1 : vector<8x32xf32>, vector<8x32xf32> -> vector<8x64xf32>
    %136 = arith.truncf %135 : vector<8x64xf32> to vector<8x64xbf16>
    %cst_39 = arith.constant dense<0.000000e+00> : vector<8x128xf32>
    %137 = tpu.matmul %136, %13, %cst_39 {dimension_numbers = #tpu.dot_dimension_numbers<[1], [0], [0], [1], [0, 0, 1, 1], [], []>} : vector<8x64xbf16>, vector<64x128xbf16>, vector<8x128xf32> -> vector<8x128xf32>
    %138 = vector.broadcast %16 : vector<1x128xf32> to vector<8x128xf32>
    %139 = arith.addf %137, %138 : vector<8x128xf32>
    %140 = arith.negf %139 : vector<8x128xf32>
    %141 = math.exp %140 : vector<8x128xf32>
    %cst_40 = arith.constant 1.000000e+00 : f32
    %142 = vector.broadcast %cst_40 : f32 to vector<8x128xf32>
    %143 = arith.addf %142, %141 : vector<8x128xf32>
    %144 = arith.divf %142, %143 : vector<8x128xf32>
    %145 = vector.extract_strided_slice %144 {offsets = [0, 0], sizes = [8, 32], strides = [1, 1]} : vector<8x128xf32> to vector<8x32xf32>
    %146 = vector.extract_strided_slice %144 {offsets = [0, 32], sizes = [8, 32], strides = [1, 1]} : vector<8x128xf32> to vector<8x32xf32>
    %147 = vector.extract_strided_slice %144 {offsets = [0, 64], sizes = [8, 32], strides = [1, 1]} : vector<8x128xf32> to vector<8x32xf32>
    %cst_41 = arith.constant 2.000000e+00 : f32
    %148 = vector.broadcast %cst_41 : f32 to vector<8x32xf32>
    %149 = arith.mulf %148, %147 : vector<8x32xf32>
    %cst_42 = arith.constant 1.000000e+00 : f32
    %150 = vector.broadcast %cst_42 : f32 to vector<8x32xf32>
    %151 = arith.subf %149, %150 : vector<8x32xf32>
    %152 = vector.extract_strided_slice %144 {offsets = [0, 96], sizes = [8, 32], strides = [1, 1]} : vector<8x128xf32> to vector<8x32xf32>
    %153 = arith.mulf %146, %22 : vector<8x32xf32>
    %154 = arith.mulf %145, %151 : vector<8x32xf32>
    %155 = arith.addf %153, %154 : vector<8x32xf32>
    %156 = math.tanh %155 : vector<8x32xf32>
    %157 = arith.mulf %152, %156 : vector<8x32xf32>
    %158 = vector.extract_strided_slice %21 {offsets = [24, 0], sizes = [8, 128], strides = [1, 1]} : vector<64x128xf32> to vector<8x128xf32>
    %159 = arith.truncf %111 : vector<8x32xf32> to vector<8x32xbf16>
    %cst_43 = arith.constant dense<0.000000e+00> : vector<8x128xf32>
    %160 = tpu.matmul %159, %3, %cst_43 {dimension_numbers = #tpu.dot_dimension_numbers<[1], [0], [0], [1], [0, 0, 1, 1], [], []>} : vector<8x32xbf16>, vector<32x128xbf16>, vector<8x128xf32> -> vector<8x128xf32>
    %161 = arith.addf %158, %160 : vector<8x128xf32>
    %162 = arith.negf %161 : vector<8x128xf32>
    %163 = math.exp %162 : vector<8x128xf32>
    %cst_44 = arith.constant 1.000000e+00 : f32
    %164 = vector.broadcast %cst_44 : f32 to vector<8x128xf32>
    %165 = arith.addf %164, %163 : vector<8x128xf32>
    %166 = arith.divf %164, %165 : vector<8x128xf32>
    %167 = vector.extract_strided_slice %166 {offsets = [0, 0], sizes = [8, 32], strides = [1, 1]} : vector<8x128xf32> to vector<8x32xf32>
    %168 = vector.extract_strided_slice %166 {offsets = [0, 32], sizes = [8, 32], strides = [1, 1]} : vector<8x128xf32> to vector<8x32xf32>
    %169 = vector.extract_strided_slice %166 {offsets = [0, 64], sizes = [8, 32], strides = [1, 1]} : vector<8x128xf32> to vector<8x32xf32>
    %cst_45 = arith.constant 2.000000e+00 : f32
    %170 = vector.broadcast %cst_45 : f32 to vector<8x32xf32>
    %171 = arith.mulf %170, %169 : vector<8x32xf32>
    %cst_46 = arith.constant 1.000000e+00 : f32
    %172 = vector.broadcast %cst_46 : f32 to vector<8x32xf32>
    %173 = arith.subf %171, %172 : vector<8x32xf32>
    %174 = vector.extract_strided_slice %166 {offsets = [0, 96], sizes = [8, 32], strides = [1, 1]} : vector<8x128xf32> to vector<8x32xf32>
    %175 = arith.mulf %168, %109 : vector<8x32xf32>
    %176 = arith.mulf %167, %173 : vector<8x32xf32>
    %177 = arith.addf %175, %176 : vector<8x32xf32>
    %178 = math.tanh %177 : vector<8x32xf32>
    %179 = arith.mulf %174, %178 : vector<8x32xf32>
    %180 = tpu.concatenate %111, %134 in 1 : vector<8x32xf32>, vector<8x32xf32> -> vector<8x64xf32>
    %181 = arith.truncf %180 : vector<8x64xf32> to vector<8x64xbf16>
    %cst_47 = arith.constant dense<0.000000e+00> : vector<8x128xf32>
    %182 = tpu.matmul %181, %8, %cst_47 {dimension_numbers = #tpu.dot_dimension_numbers<[1], [0], [0], [1], [0, 0, 1, 1], [], []>} : vector<8x64xbf16>, vector<64x128xbf16>, vector<8x128xf32> -> vector<8x128xf32>
    %183 = vector.broadcast %11 : vector<1x128xf32> to vector<8x128xf32>
    %184 = arith.addf %182, %183 : vector<8x128xf32>
    %185 = arith.negf %184 : vector<8x128xf32>
    %186 = math.exp %185 : vector<8x128xf32>
    %cst_48 = arith.constant 1.000000e+00 : f32
    %187 = vector.broadcast %cst_48 : f32 to vector<8x128xf32>
    %188 = arith.addf %187, %186 : vector<8x128xf32>
    %189 = arith.divf %187, %188 : vector<8x128xf32>
    %190 = vector.extract_strided_slice %189 {offsets = [0, 0], sizes = [8, 32], strides = [1, 1]} : vector<8x128xf32> to vector<8x32xf32>
    %191 = vector.extract_strided_slice %189 {offsets = [0, 32], sizes = [8, 32], strides = [1, 1]} : vector<8x128xf32> to vector<8x32xf32>
    %192 = vector.extract_strided_slice %189 {offsets = [0, 64], sizes = [8, 32], strides = [1, 1]} : vector<8x128xf32> to vector<8x32xf32>
    %cst_49 = arith.constant 2.000000e+00 : f32
    %193 = vector.broadcast %cst_49 : f32 to vector<8x32xf32>
    %194 = arith.mulf %193, %192 : vector<8x32xf32>
    %cst_50 = arith.constant 1.000000e+00 : f32
    %195 = vector.broadcast %cst_50 : f32 to vector<8x32xf32>
    %196 = arith.subf %194, %195 : vector<8x32xf32>
    %197 = vector.extract_strided_slice %189 {offsets = [0, 96], sizes = [8, 32], strides = [1, 1]} : vector<8x128xf32> to vector<8x32xf32>
    %198 = arith.mulf %191, %132 : vector<8x32xf32>
    %199 = arith.mulf %190, %196 : vector<8x32xf32>
    %200 = arith.addf %198, %199 : vector<8x32xf32>
    %201 = math.tanh %200 : vector<8x32xf32>
    %202 = arith.mulf %197, %201 : vector<8x32xf32>
    %203 = tpu.concatenate %134, %157 in 1 : vector<8x32xf32>, vector<8x32xf32> -> vector<8x64xf32>
    %204 = arith.truncf %203 : vector<8x64xf32> to vector<8x64xbf16>
    %cst_51 = arith.constant dense<0.000000e+00> : vector<8x128xf32>
    %205 = tpu.matmul %204, %13, %cst_51 {dimension_numbers = #tpu.dot_dimension_numbers<[1], [0], [0], [1], [0, 0, 1, 1], [], []>} : vector<8x64xbf16>, vector<64x128xbf16>, vector<8x128xf32> -> vector<8x128xf32>
    %206 = vector.broadcast %16 : vector<1x128xf32> to vector<8x128xf32>
    %207 = arith.addf %205, %206 : vector<8x128xf32>
    %208 = arith.negf %207 : vector<8x128xf32>
    %209 = math.exp %208 : vector<8x128xf32>
    %cst_52 = arith.constant 1.000000e+00 : f32
    %210 = vector.broadcast %cst_52 : f32 to vector<8x128xf32>
    %211 = arith.addf %210, %209 : vector<8x128xf32>
    %212 = arith.divf %210, %211 : vector<8x128xf32>
    %213 = vector.extract_strided_slice %212 {offsets = [0, 0], sizes = [8, 32], strides = [1, 1]} : vector<8x128xf32> to vector<8x32xf32>
    %214 = vector.extract_strided_slice %212 {offsets = [0, 32], sizes = [8, 32], strides = [1, 1]} : vector<8x128xf32> to vector<8x32xf32>
    %215 = vector.extract_strided_slice %212 {offsets = [0, 64], sizes = [8, 32], strides = [1, 1]} : vector<8x128xf32> to vector<8x32xf32>
    %cst_53 = arith.constant 2.000000e+00 : f32
    %216 = vector.broadcast %cst_53 : f32 to vector<8x32xf32>
    %217 = arith.mulf %216, %215 : vector<8x32xf32>
    %cst_54 = arith.constant 1.000000e+00 : f32
    %218 = vector.broadcast %cst_54 : f32 to vector<8x32xf32>
    %219 = arith.subf %217, %218 : vector<8x32xf32>
    %220 = vector.extract_strided_slice %212 {offsets = [0, 96], sizes = [8, 32], strides = [1, 1]} : vector<8x128xf32> to vector<8x32xf32>
    %221 = arith.mulf %214, %155 : vector<8x32xf32>
    %222 = arith.mulf %213, %219 : vector<8x32xf32>
    %223 = arith.addf %221, %222 : vector<8x32xf32>
    %224 = math.tanh %223 : vector<8x32xf32>
    %225 = arith.mulf %220, %224 : vector<8x32xf32>
    %226 = vector.extract_strided_slice %21 {offsets = [32, 0], sizes = [8, 128], strides = [1, 1]} : vector<64x128xf32> to vector<8x128xf32>
    %227 = arith.truncf %179 : vector<8x32xf32> to vector<8x32xbf16>
    %cst_55 = arith.constant dense<0.000000e+00> : vector<8x128xf32>
    %228 = tpu.matmul %227, %3, %cst_55 {dimension_numbers = #tpu.dot_dimension_numbers<[1], [0], [0], [1], [0, 0, 1, 1], [], []>} : vector<8x32xbf16>, vector<32x128xbf16>, vector<8x128xf32> -> vector<8x128xf32>
    %229 = arith.addf %226, %228 : vector<8x128xf32>
    %230 = arith.negf %229 : vector<8x128xf32>
    %231 = math.exp %230 : vector<8x128xf32>
    %cst_56 = arith.constant 1.000000e+00 : f32
    %232 = vector.broadcast %cst_56 : f32 to vector<8x128xf32>
    %233 = arith.addf %232, %231 : vector<8x128xf32>
    %234 = arith.divf %232, %233 : vector<8x128xf32>
    %235 = vector.extract_strided_slice %234 {offsets = [0, 0], sizes = [8, 32], strides = [1, 1]} : vector<8x128xf32> to vector<8x32xf32>
    %236 = vector.extract_strided_slice %234 {offsets = [0, 32], sizes = [8, 32], strides = [1, 1]} : vector<8x128xf32> to vector<8x32xf32>
    %237 = vector.extract_strided_slice %234 {offsets = [0, 64], sizes = [8, 32], strides = [1, 1]} : vector<8x128xf32> to vector<8x32xf32>
    %cst_57 = arith.constant 2.000000e+00 : f32
    %238 = vector.broadcast %cst_57 : f32 to vector<8x32xf32>
    %239 = arith.mulf %238, %237 : vector<8x32xf32>
    %cst_58 = arith.constant 1.000000e+00 : f32
    %240 = vector.broadcast %cst_58 : f32 to vector<8x32xf32>
    %241 = arith.subf %239, %240 : vector<8x32xf32>
    %242 = vector.extract_strided_slice %234 {offsets = [0, 96], sizes = [8, 32], strides = [1, 1]} : vector<8x128xf32> to vector<8x32xf32>
    %243 = arith.mulf %236, %177 : vector<8x32xf32>
    %244 = arith.mulf %235, %241 : vector<8x32xf32>
    %245 = arith.addf %243, %244 : vector<8x32xf32>
    %246 = math.tanh %245 : vector<8x32xf32>
    %247 = arith.mulf %242, %246 : vector<8x32xf32>
    %248 = tpu.concatenate %179, %202 in 1 : vector<8x32xf32>, vector<8x32xf32> -> vector<8x64xf32>
    %249 = arith.truncf %248 : vector<8x64xf32> to vector<8x64xbf16>
    %cst_59 = arith.constant dense<0.000000e+00> : vector<8x128xf32>
    %250 = tpu.matmul %249, %8, %cst_59 {dimension_numbers = #tpu.dot_dimension_numbers<[1], [0], [0], [1], [0, 0, 1, 1], [], []>} : vector<8x64xbf16>, vector<64x128xbf16>, vector<8x128xf32> -> vector<8x128xf32>
    %251 = vector.broadcast %11 : vector<1x128xf32> to vector<8x128xf32>
    %252 = arith.addf %250, %251 : vector<8x128xf32>
    %253 = arith.negf %252 : vector<8x128xf32>
    %254 = math.exp %253 : vector<8x128xf32>
    %cst_60 = arith.constant 1.000000e+00 : f32
    %255 = vector.broadcast %cst_60 : f32 to vector<8x128xf32>
    %256 = arith.addf %255, %254 : vector<8x128xf32>
    %257 = arith.divf %255, %256 : vector<8x128xf32>
    %258 = vector.extract_strided_slice %257 {offsets = [0, 0], sizes = [8, 32], strides = [1, 1]} : vector<8x128xf32> to vector<8x32xf32>
    %259 = vector.extract_strided_slice %257 {offsets = [0, 32], sizes = [8, 32], strides = [1, 1]} : vector<8x128xf32> to vector<8x32xf32>
    %260 = vector.extract_strided_slice %257 {offsets = [0, 64], sizes = [8, 32], strides = [1, 1]} : vector<8x128xf32> to vector<8x32xf32>
    %cst_61 = arith.constant 2.000000e+00 : f32
    %261 = vector.broadcast %cst_61 : f32 to vector<8x32xf32>
    %262 = arith.mulf %261, %260 : vector<8x32xf32>
    %cst_62 = arith.constant 1.000000e+00 : f32
    %263 = vector.broadcast %cst_62 : f32 to vector<8x32xf32>
    %264 = arith.subf %262, %263 : vector<8x32xf32>
    %265 = vector.extract_strided_slice %257 {offsets = [0, 96], sizes = [8, 32], strides = [1, 1]} : vector<8x128xf32> to vector<8x32xf32>
    %266 = arith.mulf %259, %200 : vector<8x32xf32>
    %267 = arith.mulf %258, %264 : vector<8x32xf32>
    %268 = arith.addf %266, %267 : vector<8x32xf32>
    %269 = math.tanh %268 : vector<8x32xf32>
    %270 = arith.mulf %265, %269 : vector<8x32xf32>
    %271 = tpu.concatenate %202, %225 in 1 : vector<8x32xf32>, vector<8x32xf32> -> vector<8x64xf32>
    %272 = arith.truncf %271 : vector<8x64xf32> to vector<8x64xbf16>
    %cst_63 = arith.constant dense<0.000000e+00> : vector<8x128xf32>
    %273 = tpu.matmul %272, %13, %cst_63 {dimension_numbers = #tpu.dot_dimension_numbers<[1], [0], [0], [1], [0, 0, 1, 1], [], []>} : vector<8x64xbf16>, vector<64x128xbf16>, vector<8x128xf32> -> vector<8x128xf32>
    %274 = vector.broadcast %16 : vector<1x128xf32> to vector<8x128xf32>
    %275 = arith.addf %273, %274 : vector<8x128xf32>
    %276 = arith.negf %275 : vector<8x128xf32>
    %277 = math.exp %276 : vector<8x128xf32>
    %cst_64 = arith.constant 1.000000e+00 : f32
    %278 = vector.broadcast %cst_64 : f32 to vector<8x128xf32>
    %279 = arith.addf %278, %277 : vector<8x128xf32>
    %280 = arith.divf %278, %279 : vector<8x128xf32>
    %281 = vector.extract_strided_slice %280 {offsets = [0, 0], sizes = [8, 32], strides = [1, 1]} : vector<8x128xf32> to vector<8x32xf32>
    %282 = vector.extract_strided_slice %280 {offsets = [0, 32], sizes = [8, 32], strides = [1, 1]} : vector<8x128xf32> to vector<8x32xf32>
    %283 = vector.extract_strided_slice %280 {offsets = [0, 64], sizes = [8, 32], strides = [1, 1]} : vector<8x128xf32> to vector<8x32xf32>
    %cst_65 = arith.constant 2.000000e+00 : f32
    %284 = vector.broadcast %cst_65 : f32 to vector<8x32xf32>
    %285 = arith.mulf %284, %283 : vector<8x32xf32>
    %cst_66 = arith.constant 1.000000e+00 : f32
    %286 = vector.broadcast %cst_66 : f32 to vector<8x32xf32>
    %287 = arith.subf %285, %286 : vector<8x32xf32>
    %288 = vector.extract_strided_slice %280 {offsets = [0, 96], sizes = [8, 32], strides = [1, 1]} : vector<8x128xf32> to vector<8x32xf32>
    %289 = arith.mulf %282, %223 : vector<8x32xf32>
    %290 = arith.mulf %281, %287 : vector<8x32xf32>
    %291 = arith.addf %289, %290 : vector<8x32xf32>
    %292 = math.tanh %291 : vector<8x32xf32>
    %293 = arith.mulf %288, %292 : vector<8x32xf32>
    %294 = vector.extract_strided_slice %21 {offsets = [40, 0], sizes = [8, 128], strides = [1, 1]} : vector<64x128xf32> to vector<8x128xf32>
    %295 = arith.truncf %247 : vector<8x32xf32> to vector<8x32xbf16>
    %cst_67 = arith.constant dense<0.000000e+00> : vector<8x128xf32>
    %296 = tpu.matmul %295, %3, %cst_67 {dimension_numbers = #tpu.dot_dimension_numbers<[1], [0], [0], [1], [0, 0, 1, 1], [], []>} : vector<8x32xbf16>, vector<32x128xbf16>, vector<8x128xf32> -> vector<8x128xf32>
    %297 = arith.addf %294, %296 : vector<8x128xf32>
    %298 = arith.negf %297 : vector<8x128xf32>
    %299 = math.exp %298 : vector<8x128xf32>
    %cst_68 = arith.constant 1.000000e+00 : f32
    %300 = vector.broadcast %cst_68 : f32 to vector<8x128xf32>
    %301 = arith.addf %300, %299 : vector<8x128xf32>
    %302 = arith.divf %300, %301 : vector<8x128xf32>
    %303 = vector.extract_strided_slice %302 {offsets = [0, 0], sizes = [8, 32], strides = [1, 1]} : vector<8x128xf32> to vector<8x32xf32>
    %304 = vector.extract_strided_slice %302 {offsets = [0, 32], sizes = [8, 32], strides = [1, 1]} : vector<8x128xf32> to vector<8x32xf32>
    %305 = vector.extract_strided_slice %302 {offsets = [0, 64], sizes = [8, 32], strides = [1, 1]} : vector<8x128xf32> to vector<8x32xf32>
    %cst_69 = arith.constant 2.000000e+00 : f32
    %306 = vector.broadcast %cst_69 : f32 to vector<8x32xf32>
    %307 = arith.mulf %306, %305 : vector<8x32xf32>
    %cst_70 = arith.constant 1.000000e+00 : f32
    %308 = vector.broadcast %cst_70 : f32 to vector<8x32xf32>
    %309 = arith.subf %307, %308 : vector<8x32xf32>
    %310 = vector.extract_strided_slice %302 {offsets = [0, 96], sizes = [8, 32], strides = [1, 1]} : vector<8x128xf32> to vector<8x32xf32>
    %311 = arith.mulf %304, %245 : vector<8x32xf32>
    %312 = arith.mulf %303, %309 : vector<8x32xf32>
    %313 = arith.addf %311, %312 : vector<8x32xf32>
    %314 = math.tanh %313 : vector<8x32xf32>
    %315 = arith.mulf %310, %314 : vector<8x32xf32>
    %316 = tpu.concatenate %247, %270 in 1 : vector<8x32xf32>, vector<8x32xf32> -> vector<8x64xf32>
    %317 = arith.truncf %316 : vector<8x64xf32> to vector<8x64xbf16>
    %cst_71 = arith.constant dense<0.000000e+00> : vector<8x128xf32>
    %318 = tpu.matmul %317, %8, %cst_71 {dimension_numbers = #tpu.dot_dimension_numbers<[1], [0], [0], [1], [0, 0, 1, 1], [], []>} : vector<8x64xbf16>, vector<64x128xbf16>, vector<8x128xf32> -> vector<8x128xf32>
    %319 = vector.broadcast %11 : vector<1x128xf32> to vector<8x128xf32>
    %320 = arith.addf %318, %319 : vector<8x128xf32>
    %321 = arith.negf %320 : vector<8x128xf32>
    %322 = math.exp %321 : vector<8x128xf32>
    %cst_72 = arith.constant 1.000000e+00 : f32
    %323 = vector.broadcast %cst_72 : f32 to vector<8x128xf32>
    %324 = arith.addf %323, %322 : vector<8x128xf32>
    %325 = arith.divf %323, %324 : vector<8x128xf32>
    %326 = vector.extract_strided_slice %325 {offsets = [0, 0], sizes = [8, 32], strides = [1, 1]} : vector<8x128xf32> to vector<8x32xf32>
    %327 = vector.extract_strided_slice %325 {offsets = [0, 32], sizes = [8, 32], strides = [1, 1]} : vector<8x128xf32> to vector<8x32xf32>
    %328 = vector.extract_strided_slice %325 {offsets = [0, 64], sizes = [8, 32], strides = [1, 1]} : vector<8x128xf32> to vector<8x32xf32>
    %cst_73 = arith.constant 2.000000e+00 : f32
    %329 = vector.broadcast %cst_73 : f32 to vector<8x32xf32>
    %330 = arith.mulf %329, %328 : vector<8x32xf32>
    %cst_74 = arith.constant 1.000000e+00 : f32
    %331 = vector.broadcast %cst_74 : f32 to vector<8x32xf32>
    %332 = arith.subf %330, %331 : vector<8x32xf32>
    %333 = vector.extract_strided_slice %325 {offsets = [0, 96], sizes = [8, 32], strides = [1, 1]} : vector<8x128xf32> to vector<8x32xf32>
    %334 = arith.mulf %327, %268 : vector<8x32xf32>
    %335 = arith.mulf %326, %332 : vector<8x32xf32>
    %336 = arith.addf %334, %335 : vector<8x32xf32>
    %337 = math.tanh %336 : vector<8x32xf32>
    %338 = arith.mulf %333, %337 : vector<8x32xf32>
    %339 = tpu.concatenate %270, %293 in 1 : vector<8x32xf32>, vector<8x32xf32> -> vector<8x64xf32>
    %340 = arith.truncf %339 : vector<8x64xf32> to vector<8x64xbf16>
    %cst_75 = arith.constant dense<0.000000e+00> : vector<8x128xf32>
    %341 = tpu.matmul %340, %13, %cst_75 {dimension_numbers = #tpu.dot_dimension_numbers<[1], [0], [0], [1], [0, 0, 1, 1], [], []>} : vector<8x64xbf16>, vector<64x128xbf16>, vector<8x128xf32> -> vector<8x128xf32>
    %342 = vector.broadcast %16 : vector<1x128xf32> to vector<8x128xf32>
    %343 = arith.addf %341, %342 : vector<8x128xf32>
    %344 = arith.negf %343 : vector<8x128xf32>
    %345 = math.exp %344 : vector<8x128xf32>
    %cst_76 = arith.constant 1.000000e+00 : f32
    %346 = vector.broadcast %cst_76 : f32 to vector<8x128xf32>
    %347 = arith.addf %346, %345 : vector<8x128xf32>
    %348 = arith.divf %346, %347 : vector<8x128xf32>
    %349 = vector.extract_strided_slice %348 {offsets = [0, 0], sizes = [8, 32], strides = [1, 1]} : vector<8x128xf32> to vector<8x32xf32>
    %350 = vector.extract_strided_slice %348 {offsets = [0, 32], sizes = [8, 32], strides = [1, 1]} : vector<8x128xf32> to vector<8x32xf32>
    %351 = vector.extract_strided_slice %348 {offsets = [0, 64], sizes = [8, 32], strides = [1, 1]} : vector<8x128xf32> to vector<8x32xf32>
    %cst_77 = arith.constant 2.000000e+00 : f32
    %352 = vector.broadcast %cst_77 : f32 to vector<8x32xf32>
    %353 = arith.mulf %352, %351 : vector<8x32xf32>
    %cst_78 = arith.constant 1.000000e+00 : f32
    %354 = vector.broadcast %cst_78 : f32 to vector<8x32xf32>
    %355 = arith.subf %353, %354 : vector<8x32xf32>
    %356 = vector.extract_strided_slice %348 {offsets = [0, 96], sizes = [8, 32], strides = [1, 1]} : vector<8x128xf32> to vector<8x32xf32>
    %357 = arith.mulf %350, %291 : vector<8x32xf32>
    %358 = arith.mulf %349, %355 : vector<8x32xf32>
    %359 = arith.addf %357, %358 : vector<8x32xf32>
    %360 = math.tanh %359 : vector<8x32xf32>
    %361 = arith.mulf %356, %360 : vector<8x32xf32>
    %362 = vector.extract_strided_slice %21 {offsets = [48, 0], sizes = [8, 128], strides = [1, 1]} : vector<64x128xf32> to vector<8x128xf32>
    %363 = arith.truncf %315 : vector<8x32xf32> to vector<8x32xbf16>
    %cst_79 = arith.constant dense<0.000000e+00> : vector<8x128xf32>
    %364 = tpu.matmul %363, %3, %cst_79 {dimension_numbers = #tpu.dot_dimension_numbers<[1], [0], [0], [1], [0, 0, 1, 1], [], []>} : vector<8x32xbf16>, vector<32x128xbf16>, vector<8x128xf32> -> vector<8x128xf32>
    %365 = arith.addf %362, %364 : vector<8x128xf32>
    %366 = arith.negf %365 : vector<8x128xf32>
    %367 = math.exp %366 : vector<8x128xf32>
    %cst_80 = arith.constant 1.000000e+00 : f32
    %368 = vector.broadcast %cst_80 : f32 to vector<8x128xf32>
    %369 = arith.addf %368, %367 : vector<8x128xf32>
    %370 = arith.divf %368, %369 : vector<8x128xf32>
    %371 = vector.extract_strided_slice %370 {offsets = [0, 0], sizes = [8, 32], strides = [1, 1]} : vector<8x128xf32> to vector<8x32xf32>
    %372 = vector.extract_strided_slice %370 {offsets = [0, 32], sizes = [8, 32], strides = [1, 1]} : vector<8x128xf32> to vector<8x32xf32>
    %373 = vector.extract_strided_slice %370 {offsets = [0, 64], sizes = [8, 32], strides = [1, 1]} : vector<8x128xf32> to vector<8x32xf32>
    %cst_81 = arith.constant 2.000000e+00 : f32
    %374 = vector.broadcast %cst_81 : f32 to vector<8x32xf32>
    %375 = arith.mulf %374, %373 : vector<8x32xf32>
    %cst_82 = arith.constant 1.000000e+00 : f32
    %376 = vector.broadcast %cst_82 : f32 to vector<8x32xf32>
    %377 = arith.subf %375, %376 : vector<8x32xf32>
    %378 = vector.extract_strided_slice %370 {offsets = [0, 96], sizes = [8, 32], strides = [1, 1]} : vector<8x128xf32> to vector<8x32xf32>
    %379 = arith.mulf %372, %313 : vector<8x32xf32>
    %380 = arith.mulf %371, %377 : vector<8x32xf32>
    %381 = arith.addf %379, %380 : vector<8x32xf32>
    %382 = math.tanh %381 : vector<8x32xf32>
    %383 = arith.mulf %378, %382 : vector<8x32xf32>
    %384 = tpu.concatenate %315, %338 in 1 : vector<8x32xf32>, vector<8x32xf32> -> vector<8x64xf32>
    %385 = arith.truncf %384 : vector<8x64xf32> to vector<8x64xbf16>
    %cst_83 = arith.constant dense<0.000000e+00> : vector<8x128xf32>
    %386 = tpu.matmul %385, %8, %cst_83 {dimension_numbers = #tpu.dot_dimension_numbers<[1], [0], [0], [1], [0, 0, 1, 1], [], []>} : vector<8x64xbf16>, vector<64x128xbf16>, vector<8x128xf32> -> vector<8x128xf32>
    %387 = vector.broadcast %11 : vector<1x128xf32> to vector<8x128xf32>
    %388 = arith.addf %386, %387 : vector<8x128xf32>
    %389 = arith.negf %388 : vector<8x128xf32>
    %390 = math.exp %389 : vector<8x128xf32>
    %cst_84 = arith.constant 1.000000e+00 : f32
    %391 = vector.broadcast %cst_84 : f32 to vector<8x128xf32>
    %392 = arith.addf %391, %390 : vector<8x128xf32>
    %393 = arith.divf %391, %392 : vector<8x128xf32>
    %394 = vector.extract_strided_slice %393 {offsets = [0, 0], sizes = [8, 32], strides = [1, 1]} : vector<8x128xf32> to vector<8x32xf32>
    %395 = vector.extract_strided_slice %393 {offsets = [0, 32], sizes = [8, 32], strides = [1, 1]} : vector<8x128xf32> to vector<8x32xf32>
    %396 = vector.extract_strided_slice %393 {offsets = [0, 64], sizes = [8, 32], strides = [1, 1]} : vector<8x128xf32> to vector<8x32xf32>
    %cst_85 = arith.constant 2.000000e+00 : f32
    %397 = vector.broadcast %cst_85 : f32 to vector<8x32xf32>
    %398 = arith.mulf %397, %396 : vector<8x32xf32>
    %cst_86 = arith.constant 1.000000e+00 : f32
    %399 = vector.broadcast %cst_86 : f32 to vector<8x32xf32>
    %400 = arith.subf %398, %399 : vector<8x32xf32>
    %401 = vector.extract_strided_slice %393 {offsets = [0, 96], sizes = [8, 32], strides = [1, 1]} : vector<8x128xf32> to vector<8x32xf32>
    %402 = arith.mulf %395, %336 : vector<8x32xf32>
    %403 = arith.mulf %394, %400 : vector<8x32xf32>
    %404 = arith.addf %402, %403 : vector<8x32xf32>
    %405 = math.tanh %404 : vector<8x32xf32>
    %406 = arith.mulf %401, %405 : vector<8x32xf32>
    %407 = tpu.concatenate %338, %361 in 1 : vector<8x32xf32>, vector<8x32xf32> -> vector<8x64xf32>
    %408 = arith.truncf %407 : vector<8x64xf32> to vector<8x64xbf16>
    %cst_87 = arith.constant dense<0.000000e+00> : vector<8x128xf32>
    %409 = tpu.matmul %408, %13, %cst_87 {dimension_numbers = #tpu.dot_dimension_numbers<[1], [0], [0], [1], [0, 0, 1, 1], [], []>} : vector<8x64xbf16>, vector<64x128xbf16>, vector<8x128xf32> -> vector<8x128xf32>
    %410 = vector.broadcast %16 : vector<1x128xf32> to vector<8x128xf32>
    %411 = arith.addf %409, %410 : vector<8x128xf32>
    %412 = arith.negf %411 : vector<8x128xf32>
    %413 = math.exp %412 : vector<8x128xf32>
    %cst_88 = arith.constant 1.000000e+00 : f32
    %414 = vector.broadcast %cst_88 : f32 to vector<8x128xf32>
    %415 = arith.addf %414, %413 : vector<8x128xf32>
    %416 = arith.divf %414, %415 : vector<8x128xf32>
    %417 = vector.extract_strided_slice %416 {offsets = [0, 0], sizes = [8, 32], strides = [1, 1]} : vector<8x128xf32> to vector<8x32xf32>
    %418 = vector.extract_strided_slice %416 {offsets = [0, 32], sizes = [8, 32], strides = [1, 1]} : vector<8x128xf32> to vector<8x32xf32>
    %419 = vector.extract_strided_slice %416 {offsets = [0, 64], sizes = [8, 32], strides = [1, 1]} : vector<8x128xf32> to vector<8x32xf32>
    %cst_89 = arith.constant 2.000000e+00 : f32
    %420 = vector.broadcast %cst_89 : f32 to vector<8x32xf32>
    %421 = arith.mulf %420, %419 : vector<8x32xf32>
    %cst_90 = arith.constant 1.000000e+00 : f32
    %422 = vector.broadcast %cst_90 : f32 to vector<8x32xf32>
    %423 = arith.subf %421, %422 : vector<8x32xf32>
    %424 = vector.extract_strided_slice %416 {offsets = [0, 96], sizes = [8, 32], strides = [1, 1]} : vector<8x128xf32> to vector<8x32xf32>
    %425 = arith.mulf %418, %359 : vector<8x32xf32>
    %426 = arith.mulf %417, %423 : vector<8x32xf32>
    %427 = arith.addf %425, %426 : vector<8x32xf32>
    %428 = math.tanh %427 : vector<8x32xf32>
    %429 = arith.mulf %424, %428 : vector<8x32xf32>
    %430 = vector.extract_strided_slice %21 {offsets = [56, 0], sizes = [8, 128], strides = [1, 1]} : vector<64x128xf32> to vector<8x128xf32>
    %431 = arith.truncf %383 : vector<8x32xf32> to vector<8x32xbf16>
    %cst_91 = arith.constant dense<0.000000e+00> : vector<8x128xf32>
    %432 = tpu.matmul %431, %3, %cst_91 {dimension_numbers = #tpu.dot_dimension_numbers<[1], [0], [0], [1], [0, 0, 1, 1], [], []>} : vector<8x32xbf16>, vector<32x128xbf16>, vector<8x128xf32> -> vector<8x128xf32>
    %433 = arith.addf %430, %432 : vector<8x128xf32>
    %434 = arith.negf %433 : vector<8x128xf32>
    %435 = math.exp %434 : vector<8x128xf32>
    %cst_92 = arith.constant 1.000000e+00 : f32
    %436 = vector.broadcast %cst_92 : f32 to vector<8x128xf32>
    %437 = arith.addf %436, %435 : vector<8x128xf32>
    %438 = arith.divf %436, %437 : vector<8x128xf32>
    %439 = vector.extract_strided_slice %438 {offsets = [0, 0], sizes = [8, 32], strides = [1, 1]} : vector<8x128xf32> to vector<8x32xf32>
    %440 = vector.extract_strided_slice %438 {offsets = [0, 32], sizes = [8, 32], strides = [1, 1]} : vector<8x128xf32> to vector<8x32xf32>
    %441 = vector.extract_strided_slice %438 {offsets = [0, 64], sizes = [8, 32], strides = [1, 1]} : vector<8x128xf32> to vector<8x32xf32>
    %cst_93 = arith.constant 2.000000e+00 : f32
    %442 = vector.broadcast %cst_93 : f32 to vector<8x32xf32>
    %443 = arith.mulf %442, %441 : vector<8x32xf32>
    %cst_94 = arith.constant 1.000000e+00 : f32
    %444 = vector.broadcast %cst_94 : f32 to vector<8x32xf32>
    %445 = arith.subf %443, %444 : vector<8x32xf32>
    %446 = vector.extract_strided_slice %438 {offsets = [0, 96], sizes = [8, 32], strides = [1, 1]} : vector<8x128xf32> to vector<8x32xf32>
    %447 = arith.mulf %440, %381 : vector<8x32xf32>
    %448 = arith.mulf %439, %445 : vector<8x32xf32>
    %449 = arith.addf %447, %448 : vector<8x32xf32>
    %450 = math.tanh %449 : vector<8x32xf32>
    %451 = arith.mulf %446, %450 : vector<8x32xf32>
    %452 = tpu.concatenate %383, %406 in 1 : vector<8x32xf32>, vector<8x32xf32> -> vector<8x64xf32>
    %453 = arith.truncf %452 : vector<8x64xf32> to vector<8x64xbf16>
    %cst_95 = arith.constant dense<0.000000e+00> : vector<8x128xf32>
    %454 = tpu.matmul %453, %8, %cst_95 {dimension_numbers = #tpu.dot_dimension_numbers<[1], [0], [0], [1], [0, 0, 1, 1], [], []>} : vector<8x64xbf16>, vector<64x128xbf16>, vector<8x128xf32> -> vector<8x128xf32>
    %455 = vector.broadcast %11 : vector<1x128xf32> to vector<8x128xf32>
    %456 = arith.addf %454, %455 : vector<8x128xf32>
    %457 = arith.negf %456 : vector<8x128xf32>
    %458 = math.exp %457 : vector<8x128xf32>
    %cst_96 = arith.constant 1.000000e+00 : f32
    %459 = vector.broadcast %cst_96 : f32 to vector<8x128xf32>
    %460 = arith.addf %459, %458 : vector<8x128xf32>
    %461 = arith.divf %459, %460 : vector<8x128xf32>
    %462 = vector.extract_strided_slice %461 {offsets = [0, 0], sizes = [8, 32], strides = [1, 1]} : vector<8x128xf32> to vector<8x32xf32>
    %463 = vector.extract_strided_slice %461 {offsets = [0, 32], sizes = [8, 32], strides = [1, 1]} : vector<8x128xf32> to vector<8x32xf32>
    %464 = vector.extract_strided_slice %461 {offsets = [0, 64], sizes = [8, 32], strides = [1, 1]} : vector<8x128xf32> to vector<8x32xf32>
    %cst_97 = arith.constant 2.000000e+00 : f32
    %465 = vector.broadcast %cst_97 : f32 to vector<8x32xf32>
    %466 = arith.mulf %465, %464 : vector<8x32xf32>
    %cst_98 = arith.constant 1.000000e+00 : f32
    %467 = vector.broadcast %cst_98 : f32 to vector<8x32xf32>
    %468 = arith.subf %466, %467 : vector<8x32xf32>
    %469 = vector.extract_strided_slice %461 {offsets = [0, 96], sizes = [8, 32], strides = [1, 1]} : vector<8x128xf32> to vector<8x32xf32>
    %470 = arith.mulf %463, %404 : vector<8x32xf32>
    %471 = arith.mulf %462, %468 : vector<8x32xf32>
    %472 = arith.addf %470, %471 : vector<8x32xf32>
    %473 = math.tanh %472 : vector<8x32xf32>
    %474 = arith.mulf %469, %473 : vector<8x32xf32>
    %475 = tpu.concatenate %406, %429 in 1 : vector<8x32xf32>, vector<8x32xf32> -> vector<8x64xf32>
    %476 = arith.truncf %475 : vector<8x64xf32> to vector<8x64xbf16>
    %cst_99 = arith.constant dense<0.000000e+00> : vector<8x128xf32>
    %477 = tpu.matmul %476, %13, %cst_99 {dimension_numbers = #tpu.dot_dimension_numbers<[1], [0], [0], [1], [0, 0, 1, 1], [], []>} : vector<8x64xbf16>, vector<64x128xbf16>, vector<8x128xf32> -> vector<8x128xf32>
    %478 = vector.broadcast %16 : vector<1x128xf32> to vector<8x128xf32>
    %479 = arith.addf %477, %478 : vector<8x128xf32>
    %480 = arith.negf %479 : vector<8x128xf32>
    %481 = math.exp %480 : vector<8x128xf32>
    %cst_100 = arith.constant 1.000000e+00 : f32
    %482 = vector.broadcast %cst_100 : f32 to vector<8x128xf32>
    %483 = arith.addf %482, %481 : vector<8x128xf32>
    %484 = arith.divf %482, %483 : vector<8x128xf32>
    %485 = vector.extract_strided_slice %484 {offsets = [0, 0], sizes = [8, 32], strides = [1, 1]} : vector<8x128xf32> to vector<8x32xf32>
    %486 = vector.extract_strided_slice %484 {offsets = [0, 32], sizes = [8, 32], strides = [1, 1]} : vector<8x128xf32> to vector<8x32xf32>
    %487 = vector.extract_strided_slice %484 {offsets = [0, 64], sizes = [8, 32], strides = [1, 1]} : vector<8x128xf32> to vector<8x32xf32>
    %cst_101 = arith.constant 2.000000e+00 : f32
    %488 = vector.broadcast %cst_101 : f32 to vector<8x32xf32>
    %489 = arith.mulf %488, %487 : vector<8x32xf32>
    %cst_102 = arith.constant 1.000000e+00 : f32
    %490 = vector.broadcast %cst_102 : f32 to vector<8x32xf32>
    %491 = arith.subf %489, %490 : vector<8x32xf32>
    %492 = vector.extract_strided_slice %484 {offsets = [0, 96], sizes = [8, 32], strides = [1, 1]} : vector<8x128xf32> to vector<8x32xf32>
    %493 = arith.mulf %486, %427 : vector<8x32xf32>
    %494 = arith.mulf %485, %491 : vector<8x32xf32>
    %495 = arith.addf %493, %494 : vector<8x32xf32>
    %496 = math.tanh %495 : vector<8x32xf32>
    %497 = arith.mulf %492, %496 : vector<8x32xf32>
    %498 = tpu.concatenate %451, %474 in 1 : vector<8x32xf32>, vector<8x32xf32> -> vector<8x64xf32>
    %499 = arith.truncf %498 : vector<8x64xf32> to vector<8x64xbf16>
    %cst_103 = arith.constant dense<0.000000e+00> : vector<8x128xf32>
    %500 = tpu.matmul %499, %8, %cst_103 {dimension_numbers = #tpu.dot_dimension_numbers<[1], [0], [0], [1], [0, 0, 1, 1], [], []>} : vector<8x64xbf16>, vector<64x128xbf16>, vector<8x128xf32> -> vector<8x128xf32>
    %501 = vector.broadcast %11 : vector<1x128xf32> to vector<8x128xf32>
    %502 = arith.addf %500, %501 : vector<8x128xf32>
    %503 = arith.negf %502 : vector<8x128xf32>
    %504 = math.exp %503 : vector<8x128xf32>
    %cst_104 = arith.constant 1.000000e+00 : f32
    %505 = vector.broadcast %cst_104 : f32 to vector<8x128xf32>
    %506 = arith.addf %505, %504 : vector<8x128xf32>
    %507 = arith.divf %505, %506 : vector<8x128xf32>
    %508 = vector.extract_strided_slice %507 {offsets = [0, 0], sizes = [8, 32], strides = [1, 1]} : vector<8x128xf32> to vector<8x32xf32>
    %509 = vector.extract_strided_slice %507 {offsets = [0, 32], sizes = [8, 32], strides = [1, 1]} : vector<8x128xf32> to vector<8x32xf32>
    %510 = vector.extract_strided_slice %507 {offsets = [0, 64], sizes = [8, 32], strides = [1, 1]} : vector<8x128xf32> to vector<8x32xf32>
    %cst_105 = arith.constant 2.000000e+00 : f32
    %511 = vector.broadcast %cst_105 : f32 to vector<8x32xf32>
    %512 = arith.mulf %511, %510 : vector<8x32xf32>
    %cst_106 = arith.constant 1.000000e+00 : f32
    %513 = vector.broadcast %cst_106 : f32 to vector<8x32xf32>
    %514 = arith.subf %512, %513 : vector<8x32xf32>
    %515 = vector.extract_strided_slice %507 {offsets = [0, 96], sizes = [8, 32], strides = [1, 1]} : vector<8x128xf32> to vector<8x32xf32>
    %516 = arith.mulf %509, %472 : vector<8x32xf32>
    %517 = arith.mulf %508, %514 : vector<8x32xf32>
    %518 = arith.addf %516, %517 : vector<8x32xf32>
    %519 = math.tanh %518 : vector<8x32xf32>
    %520 = arith.mulf %515, %519 : vector<8x32xf32>
    %521 = tpu.concatenate %474, %497 in 1 : vector<8x32xf32>, vector<8x32xf32> -> vector<8x64xf32>
    %522 = arith.truncf %521 : vector<8x64xf32> to vector<8x64xbf16>
    %cst_107 = arith.constant dense<0.000000e+00> : vector<8x128xf32>
    %523 = tpu.matmul %522, %13, %cst_107 {dimension_numbers = #tpu.dot_dimension_numbers<[1], [0], [0], [1], [0, 0, 1, 1], [], []>} : vector<8x64xbf16>, vector<64x128xbf16>, vector<8x128xf32> -> vector<8x128xf32>
    %524 = vector.broadcast %16 : vector<1x128xf32> to vector<8x128xf32>
    %525 = arith.addf %523, %524 : vector<8x128xf32>
    %526 = arith.negf %525 : vector<8x128xf32>
    %527 = math.exp %526 : vector<8x128xf32>
    %cst_108 = arith.constant 1.000000e+00 : f32
    %528 = vector.broadcast %cst_108 : f32 to vector<8x128xf32>
    %529 = arith.addf %528, %527 : vector<8x128xf32>
    %530 = arith.divf %528, %529 : vector<8x128xf32>
    %531 = vector.extract_strided_slice %530 {offsets = [0, 0], sizes = [8, 32], strides = [1, 1]} : vector<8x128xf32> to vector<8x32xf32>
    %532 = vector.extract_strided_slice %530 {offsets = [0, 32], sizes = [8, 32], strides = [1, 1]} : vector<8x128xf32> to vector<8x32xf32>
    %533 = vector.extract_strided_slice %530 {offsets = [0, 64], sizes = [8, 32], strides = [1, 1]} : vector<8x128xf32> to vector<8x32xf32>
    %cst_109 = arith.constant 2.000000e+00 : f32
    %534 = vector.broadcast %cst_109 : f32 to vector<8x32xf32>
    %535 = arith.mulf %534, %533 : vector<8x32xf32>
    %cst_110 = arith.constant 1.000000e+00 : f32
    %536 = vector.broadcast %cst_110 : f32 to vector<8x32xf32>
    %537 = arith.subf %535, %536 : vector<8x32xf32>
    %538 = vector.extract_strided_slice %530 {offsets = [0, 96], sizes = [8, 32], strides = [1, 1]} : vector<8x128xf32> to vector<8x32xf32>
    %539 = arith.mulf %532, %495 : vector<8x32xf32>
    %540 = arith.mulf %531, %537 : vector<8x32xf32>
    %541 = arith.addf %539, %540 : vector<8x32xf32>
    %542 = math.tanh %541 : vector<8x32xf32>
    %543 = arith.mulf %538, %542 : vector<8x32xf32>
    %544 = tpu.concatenate %520, %543 in 1 : vector<8x32xf32>, vector<8x32xf32> -> vector<8x64xf32>
    %545 = arith.truncf %544 : vector<8x64xf32> to vector<8x64xbf16>
    %cst_111 = arith.constant dense<0.000000e+00> : vector<8x128xf32>
    %546 = tpu.matmul %545, %13, %cst_111 {dimension_numbers = #tpu.dot_dimension_numbers<[1], [0], [0], [1], [0, 0, 1, 1], [], []>} : vector<8x64xbf16>, vector<64x128xbf16>, vector<8x128xf32> -> vector<8x128xf32>
    %547 = vector.broadcast %16 : vector<1x128xf32> to vector<8x128xf32>
    %548 = arith.addf %546, %547 : vector<8x128xf32>
    %549 = arith.negf %548 : vector<8x128xf32>
    %550 = math.exp %549 : vector<8x128xf32>
    %cst_112 = arith.constant 1.000000e+00 : f32
    %551 = vector.broadcast %cst_112 : f32 to vector<8x128xf32>
    %552 = arith.addf %551, %550 : vector<8x128xf32>
    %553 = arith.divf %551, %552 : vector<8x128xf32>
    %554 = vector.extract_strided_slice %553 {offsets = [0, 0], sizes = [8, 32], strides = [1, 1]} : vector<8x128xf32> to vector<8x32xf32>
    %555 = vector.extract_strided_slice %553 {offsets = [0, 32], sizes = [8, 32], strides = [1, 1]} : vector<8x128xf32> to vector<8x32xf32>
    %556 = vector.extract_strided_slice %553 {offsets = [0, 64], sizes = [8, 32], strides = [1, 1]} : vector<8x128xf32> to vector<8x32xf32>
    %cst_113 = arith.constant 2.000000e+00 : f32
    %557 = vector.broadcast %cst_113 : f32 to vector<8x32xf32>
    %558 = arith.mulf %557, %556 : vector<8x32xf32>
    %cst_114 = arith.constant 1.000000e+00 : f32
    %559 = vector.broadcast %cst_114 : f32 to vector<8x32xf32>
    %560 = arith.subf %558, %559 : vector<8x32xf32>
    %561 = vector.extract_strided_slice %553 {offsets = [0, 96], sizes = [8, 32], strides = [1, 1]} : vector<8x128xf32> to vector<8x32xf32>
    %562 = arith.mulf %555, %541 : vector<8x32xf32>
    %563 = arith.mulf %554, %560 : vector<8x32xf32>
    %564 = arith.addf %562, %563 : vector<8x32xf32>
    %565 = math.tanh %564 : vector<8x32xf32>
    %566 = arith.mulf %561, %565 : vector<8x32xf32>
    %c0_115 = arith.constant 0 : index
    %c0_116 = arith.constant 0 : index
    %567 = vector.load %arg2[%c0_115, %c0_116] : memref<35x16xf32, #tpu.memory_space<vmem>>, vector<32x16xf32>
    %c32_117 = arith.constant 32 : index
    %c0_118 = arith.constant 0 : index
    %568 = vector.load %arg2[%c32_117, %c0_118] : memref<35x16xf32, #tpu.memory_space<vmem>>, vector<1x16xf32>
    %c33 = arith.constant 33 : index
    %c0_119 = arith.constant 0 : index
    %569 = vector.load %arg2[%c33, %c0_119] : memref<35x16xf32, #tpu.memory_space<vmem>>, vector<1x16xf32>
    %c34 = arith.constant 34 : index
    %c0_120 = arith.constant 0 : index
    %570 = vector.load %arg2[%c34, %c0_120] : memref<35x16xf32, #tpu.memory_space<vmem>>, vector<1x1xf32>
    %571 = arith.truncf %566 : vector<8x32xf32> to vector<8x32xbf16>
    %572 = arith.truncf %567 : vector<32x16xf32> to vector<32x16xbf16>
    %cst_121 = arith.constant dense<0.000000e+00> : vector<8x16xf32>
    %573 = tpu.matmul %571, %572, %cst_121 {dimension_numbers = #tpu.dot_dimension_numbers<[1], [0], [0], [1], [0, 0, 1, 1], [], []>} : vector<8x32xbf16>, vector<32x16xbf16>, vector<8x16xf32> -> vector<8x16xf32>
    %574 = vector.broadcast %568 : vector<1x16xf32> to vector<8x16xf32>
    %575 = arith.addf %573, %574 : vector<8x16xf32>
    %cst_122 = arith.constant 0.000000e+00 : f32
    %576 = vector.broadcast %cst_122 : f32 to vector<8x16xf32>
    %577 = arith.maximumf %575, %576 : vector<8x16xf32>
    %578 = vector.broadcast %569 : vector<1x16xf32> to vector<8x16xf32>
    %579 = arith.mulf %577, %578 : vector<8x16xf32>
    %cst_123 = arith.constant dense<0.000000e+00> : vector<8xf32>
    %580 = vector.multi_reduction <add>, %579, %cst_123 [1] : vector<8x16xf32> to vector<8xf32>
    %581 = vector.shape_cast %580 : vector<8xf32> to vector<8x1xf32>
    %582 = vector.broadcast %570 : vector<1x1xf32> to vector<8x1xf32>
    %583 = arith.addf %581, %582 : vector<8x1xf32>
    %584 = arith.negf %583 : vector<8x1xf32>
    %585 = math.exp %584 : vector<8x1xf32>
    %cst_124 = arith.constant 1.000000e+00 : f32
    %586 = vector.broadcast %cst_124 : f32 to vector<8x1xf32>
    %587 = arith.addf %586, %585 : vector<8x1xf32>
    %588 = arith.divf %586, %587 : vector<8x1xf32>
    %c0_125 = arith.constant 0 : index
    %c0_126 = arith.constant 0 : index
    %589 = vector.load %arg3[%c0_125, %c0_126] : memref<8x1xf32, #tpu.memory_space<vmem>>, vector<8x1xf32>
    tpu.vector_store %arg3[%c0_125, %c0_126], %588 {strides = array<i32>} : memref<8x1xf32, #tpu.memory_space<vmem>>, vector<8x1xf32>,
    return
  }
}

</mosaic_0001>

<llo_original>
// kernel: tpu_custom_call.1
$region0: #{tpu_custom_call.1}
  #allocation0 [shape = 'u32[]', space=smem, size = 0x4, offset = 0x4, fixed_abs, tag = 'smem constant byte address 0x4 - core index']
  #allocation1 [shape = 'u32[144,128]{1,0:T(1,128)}', space=vmem, size = 0x12000, scoped, tag = 'internal scratch']
  %s0 = inlined_call_operand.vmem [shape: f32[64,32], index: 0, kind: input, shape index: {}]
  %s1 = inlined_call_operand.vmem [shape: bf16[3,65,128], index: 1, kind: input, shape index: {}]
  %s2 = inlined_call_operand.vmem [shape: f32[35,16], index: 2, kind: input, shape index: {}]
  %s3 = inlined_call_operand.vmem [shape: f32[8,1], index: 3, kind: output, shape index: {}]
  %s4 = sld [smem:[#allocation0]]
  $region22: #{tpu_custom_call.1} parent=0
    _
  %s6 = ssub.s32 1, %s4
  %s7 = scalar_select 0, %s6, %s4
  // Predicated region
  $region2: #{tpu_custom_call.1} parent=0 // pred_check
    _
  $region3: #{tpu_custom_call.1} parent=0 // pred_check_branch
    %9 = sbr.rel (0) target = $region5
  $region4: #{tpu_custom_call.1} parent=0 // pred_region
    _
  $region5: #{tpu_custom_call.1} parent=0 // pred_fallthru
    _
  // Predicated region
  $region6: #{tpu_custom_call.1} parent=0 // pred_check
    _
  $region7: #{tpu_custom_call.1} parent=0 // pred_check_branch
    %11 = sbr.rel (0) target = $region9
  $region8: #{tpu_custom_call.1} parent=0 // pred_region
    _
  $region9: #{tpu_custom_call.1} parent=0 // pred_fallthru
    _
  // Predicated region
  $region10: #{tpu_custom_call.1} parent=0 // pred_check
    _
  $region11: #{tpu_custom_call.1} parent=0 // pred_check_branch
    %13 = sbr.rel (0) target = $region13
  $region12: #{tpu_custom_call.1} parent=0 // pred_region
    _
  $region13: #{tpu_custom_call.1} parent=0 // pred_fallthru
    _
  %v15 = vld [vmem:[%s1] sm:$0xf]
  %v16 = vld [vmem:[%s1 + $0x4] sm:$0xf]
  %v17 = vld [vmem:[%s1 + $0x8] sm:$0xf]
  %v18 = vld [vmem:[%s1 + $0xc] sm:$0xf]
  %v19 = vld [vmem:[%s1 + $0x10] sm:$0xf]
  %v20 = vld [vmem:[%s1 + $0x14] sm:$0xf]
  %v21 = vld [vmem:[%s1 + $0x18] sm:$0xf]
  %v22 = vld [vmem:[%s1 + $0x1c] sm:$0xf]
  %v23 = vld [vmem:[%s1 + $0x20] sm:$0x1]
  %v24 = vunpack.c.l.bf16 %v23
  %s25 = scalar_lea.vmem %s1, 36
  %v26 = vld [vmem:[%s25] sm:$0xf]
  %v27 = vld [vmem:[%s25 + $0x4] sm:$0xf]
  %v28 = vld [vmem:[%s25 + $0x8] sm:$0xf]
  %v29 = vld [vmem:[%s25 + $0xc] sm:$0xf]
  %v30 = vld [vmem:[%s25 + $0x10] sm:$0xf]
  %v31 = vld [vmem:[%s25 + $0x14] sm:$0xf]
  %v32 = vld [vmem:[%s25 + $0x18] sm:$0xf]
  %v33 = vld [vmem:[%s25 + $0x1c] sm:$0xf]
  %v34 = vld [vmem:[%s25 + $0x20] sm:$0x1]
  %v35 = vunpack.c.l.bf16 %v34
  %s36 = scalar_lea.vmem %s1, 72
  %v37 = vld [vmem:[%s36] sm:$0xf]
  %v38 = vld [vmem:[%s36 + $0x4] sm:$0xf]
  %v39 = vld [vmem:[%s36 + $0x8] sm:$0xf]
  %v40 = vld [vmem:[%s36 + $0xc] sm:$0xf]
  %v41 = vld [vmem:[%s36 + $0x10] sm:$0xf]
  %v42 = vld [vmem:[%s36 + $0x14] sm:$0xf]
  %v43 = vld [vmem:[%s36 + $0x18] sm:$0xf]
  %v44 = vld [vmem:[%s36 + $0x1c] sm:$0xf]
  %v45 = vld [vmem:[%s36 + $0x20] sm:$0x1]
  %v46 = vunpack.c.l.bf16 %v45
  %v47 = vld [vmem:[%s0] sm:$0xff]
  %v48 = vld [vmem:[%s0 + $0x8] sm:$0xff]
  %v49 = vld [vmem:[%s0 + $0x10] sm:$0xff]
  %v50 = vld [vmem:[%s0 + $0x18] sm:$0xff]
  %v51 = vld [vmem:[%s0 + $0x20] sm:$0xff]
  %v52 = vld [vmem:[%s0 + $0x28] sm:$0xff]
  %v53 = vld [vmem:[%s0 + $0x30] sm:$0xff]
  %v54 = vld [vmem:[%s0 + $0x38] sm:$0xff]
  %v55 = vpack.c.bf16 %v48, %v47
  %v56 = vpack.c.bf16 %v50, %v49
  %v57 = vpack.c.bf16 %v52, %v51
  %v58 = vpack.c.bf16 %v54, %v53
  %v59 = vlaneseq
  %v60 = vshrl.u32 %v59, 7
  %v61 = vsub.s32 0, %v60
  %v62 = vrot.slane %v24, %v61
  %v67 = vunpack.c.l.b16 %v15
  %v68 = vunpack.c.l.b16 %v16
  %v69 = vunpack.c.l.b16 %v17
  %v70 = vunpack.c.l.b16 %v18
  %v71 = vpack.c.b16 %v68, %v67
  %v72 = vpack.c.b16 %v70, %v69
  %vm75 = vcmask 261120
  %v77 = vsel %vm75, %v55, 0
  %v80 = vsel %vm75, %v56, 0
  %v83 = vsel %vm75, %v57, 0
  %v86 = vsel %vm75, %v58, 0
  %88 = vmatprep.subr.bf16.mxu0 0
  %89 = vmatpush1.bf16.msra.mxu0 %v71
  %90 = vmatprep.subr.bf16.mxu0 0
  %91 = vmatpush1.bf16.msra.mxu0 %v72
  %92 = vmatprep.subr.bf16.mxu0 0
  %93 = vmatpush1.bf16.msra.mxu0 0
  %94 = vmatprep.subr.bf16.mxu0 0
  %95 = vmatpush1.bf16.msra.mxu0 0
  %96 = vmatprep.subr.bf16.mxu0 0
  %97 = vmatpush1.bf16.msra.mxu0 0
  %98 = vmatprep.subr.bf16.mxu0 0
  %99 = vmatpush1.bf16.msra.mxu0 0
  %100 = vmatprep.subr.bf16.mxu0 0
  %101 = vmatpush1.bf16.msra.mxu0 0
  %102 = vmatprep.subr.bf16.mxu0 0
  %103 = vmatpush1.bf16.msra.mxu0 0
  %104 = vmatprep.subr.bf16.mxu0 0
  %105 = vmatpush1.bf16.msra.mxu0 0
  %106 = vmatprep.subr.bf16.mxu0 0
  %107 = vmatpush1.bf16.msra.mxu0 0
  %108 = vmatprep.subr.bf16.mxu0 0
  %109 = vmatpush1.bf16.msra.mxu0 0
  %110 = vmatprep.subr.bf16.mxu0 0
  %111 = vmatpush1.bf16.msra.mxu0 0
  %112 = vmatprep.subr.bf16.mxu0 0
  %113 = vmatpush1.bf16.msra.mxu0 0
  %114 = vmatprep.subr.bf16.mxu0 0
  %115 = vmatpush1.bf16.msra.mxu0 0
  %116 = vmatprep.subr.bf16.mxu0 0
  %117 = vmatpush1.bf16.msra.mxu0 0
  %118 = vmatprep.subr.bf16.mxu0 0
  %119 = vmatpush1.bf16.msra.mxu0 0
  %120 = vmatprep.mubr.bf16.mxu0 0
  %121 = vmatmul.mubr.bf16.gmra.mrb[0].mxu0 %v77
  %v122 = vpop.f32.mrb[0].mxu0
  %v123 = vadd.f32 %v62, %v122
  %v124 = vpop.f32.mrb[0].mxu0
  %v125 = vpop.f32.mrb[0].mxu0
  %v126 = vadd.f32 %v62, %v125
  %v127 = vpop.f32.mrb[0].mxu0
  %128 = vmatprep.mubr.bf16.mxu0 0
  %129 = vmatmul.mubr.bf16.gmra.mrb[0].mxu0 %v80
  %v130 = vpop.f32.mrb[0].mxu0
  %v131 = vadd.f32 %v62, %v130
  %v132 = vpop.f32.mrb[0].mxu0
  %v133 = vpop.f32.mrb[0].mxu0
  %v134 = vadd.f32 %v62, %v133
  %v135 = vpop.f32.mrb[0].mxu0
  %136 = vmatprep.mubr.bf16.mxu0 0
  %137 = vmatmul.mubr.bf16.gmra.mrb[0].mxu0 %v83
  %v138 = vpop.f32.mrb[0].mxu0
  %v139 = vadd.f32 %v62, %v138
  %v140 = vpop.f32.mrb[0].mxu0
  %v141 = vpop.f32.mrb[0].mxu0
  %v142 = vadd.f32 %v62, %v141
  %v143 = vpop.f32.mrb[0].mxu0
  %144 = vmatprep.mubr.bf16.mxu0 0
  %145 = vmatmul.mubr.bf16.gmra.mrb[0].mxu0 %v86
  %v146 = vpop.f32.mrb[0].mxu0
  %v147 = vadd.f32 %v62, %v146
  %v148 = vpop.f32.mrb[0].mxu0
  %v149 = vpop.f32.mrb[0].mxu0
  %v150 = vadd.f32 %v62, %v149
  %v151 = vpop.f32.mrb[0].mxu0
  %152 = vdwg.mxu0
  %v157 = vunpack.c.l.b16 %v19
  %v158 = vunpack.c.l.b16 %v20
  %v159 = vunpack.c.l.b16 %v21
  %v160 = vunpack.c.l.b16 %v22
  %v161 = vpack.c.b16 %v158, %v157
  %v162 = vpack.c.b16 %v160, %v159
  %v166 = vsel %vm75, 0, 0
  %168 = vmatprep.subr.bf16.mxu0 0
  %169 = vmatpush1.bf16.msra.mxu0 %v161
  %170 = vmatprep.subr.bf16.mxu0 0
  %171 = vmatpush1.bf16.msra.mxu0 %v162
  %172 = vmatprep.subr.bf16.mxu0 0
  %173 = vmatpush1.bf16.msra.mxu0 0
  %174 = vmatprep.subr.bf16.mxu0 0
  %175 = vmatpush1.bf16.msra.mxu0 0
  %176 = vmatprep.subr.bf16.mxu0 0
  %177 = vmatpush1.bf16.msra.mxu0 0
  %178 = vmatprep.subr.bf16.mxu0 0
  %179 = vmatpush1.bf16.msra.mxu0 0
  %180 = vmatprep.subr.bf16.mxu0 0
  %181 = vmatpush1.bf16.msra.mxu0 0
  %182 = vmatprep.subr.bf16.mxu0 0
  %183 = vmatpush1.bf16.msra.mxu0 0
  %184 = vmatprep.subr.bf16.mxu0 0
  %185 = vmatpush1.bf16.msra.mxu0 0
  %186 = vmatprep.subr.bf16.mxu0 0
  %187 = vmatpush1.bf16.msra.mxu0 0
  %188 = vmatprep.subr.bf16.mxu0 0
  %189 = vmatpush1.bf16.msra.mxu0 0
  %190 = vmatprep.subr.bf16.mxu0 0
  %191 = vmatpush1.bf16.msra.mxu0 0
  %192 = vmatprep.subr.bf16.mxu0 0
  %193 = vmatpush1.bf16.msra.mxu0 0
  %194 = vmatprep.subr.bf16.mxu0 0
  %195 = vmatpush1.bf16.msra.mxu0 0
  %196 = vmatprep.subr.bf16.mxu0 0
  %197 = vmatpush1.bf16.msra.mxu0 0
  %198 = vmatprep.subr.bf16.mxu0 0
  %199 = vmatpush1.bf16.msra.mxu0 0
  %200 = vmatprep.mubr.bf16.mxu0 0
  %201 = vmatmul.mubr.bf16.gmra.mrb[0].mxu0 %v166
  %v202 = vpop.f32.mrb[0].mxu0
  %v203 = vadd.f32 0.0, %v202
  %v204 = vpop.f32.mrb[0].mxu0
  %v205 = vpop.f32.mrb[0].mxu0
  %v206 = vpop.f32.mrb[0].mxu0
  %207 = vdwg.mxu0
  %v208 = vadd.f32 %v123, %v203
  %v209 = vxor.u32 %v208, 2147483648
  %v210 = vmul.f32 %v209, 1.442695
  %v211 = vpow.pop %v210
  %v212 = vadd.f32 %v211, 1.0
  %v213 = vrcp.pop %v212
  %v214 = vmul.f32 1.0, %v213
  %v215 = vmul.f32 %v214, 2.0
  %v216 = vsub.f32 %v215, 1.0
  %v217 = vmul.f32 %v214, 0.0
  %219 = vrot.lane.b32.xlu0 %v216, 64
  %v220 = vpop.permute.xlu0 %219
  %v222 = vmul.f32 %v214, %v220
  %224 = vrot.lane.b32.xlu0 %v222, 32
  %v225 = vpop.permute.xlu0 %224
  %v227 = vadd.f32 %v217, %v225
  %v228 = vtanh.pop %v227
  %230 = vrot.lane.b32.xlu0 %v228, 64
  %v231 = vpop.permute.xlu0 %230
  %v233 = vmul.f32 %v214, %v231
  %v234 = vpack.c.bf16 %v233, %v233
  %236 = vrot.lane.b32.xlu0 %v234, 32
  %v237 = vpop.permute.xlu0 %236
  %v239 = vsel %vm75, %v237, 0
  %241 = vmatprep.subr.bf16.mxu0 0
  %242 = vmatpush1.bf16.msra.mxu0 %v161
  %243 = vmatprep.subr.bf16.mxu0 0
  %244 = vmatpush1.bf16.msra.mxu0 %v162
  %245 = vmatprep.subr.bf16.mxu0 0
  %246 = vmatpush1.bf16.msra.mxu0 0
  %247 = vmatprep.subr.bf16.mxu0 0
  %248 = vmatpush1.bf16.msra.mxu0 0
  %249 = vmatprep.subr.bf16.mxu0 0
  %250 = vmatpush1.bf16.msra.mxu0 0
  %251 = vmatprep.subr.bf16.mxu0 0
  %252 = vmatpush1.bf16.msra.mxu0 0
  %253 = vmatprep.subr.bf16.mxu0 0
  %254 = vmatpush1.bf16.msra.mxu0 0
  %255 = vmatprep.subr.bf16.mxu0 0
  %256 = vmatpush1.bf16.msra.mxu0 0
  %257 = vmatprep.subr.bf16.mxu0 0
  %258 = vmatpush1.bf16.msra.mxu0 0
  %259 = vmatprep.subr.bf16.mxu0 0
  %260 = vmatpush1.bf16.msra.mxu0 0
  %261 = vmatprep.subr.bf16.mxu0 0
  %262 = vmatpush1.bf16.msra.mxu0 0
  %263 = vmatprep.subr.bf16.mxu0 0
  %264 = vmatpush1.bf16.msra.mxu0 0
  %265 = vmatprep.subr.bf16.mxu0 0
  %266 = vmatpush1.bf16.msra.mxu0 0
  %267 = vmatprep.subr.bf16.mxu0 0
  %268 = vmatpush1.bf16.msra.mxu0 0
  %269 = vmatprep.subr.bf16.mxu0 0
  %270 = vmatpush1.bf16.msra.mxu0 0
  %271 = vmatprep.subr.bf16.mxu0 0
  %272 = vmatpush1.bf16.msra.mxu0 0
  %273 = vmatprep.mubr.bf16.mxu0 0
  %274 = vmatmul.mubr.bf16.gmra.mrb[0].mxu0 %v239
  %v275 = vpop.f32.mrb[0].mxu0
  %v276 = vadd.f32 0.0, %v275
  %v277 = vpop.f32.mrb[0].mxu0
  %v278 = vpop.f32.mrb[0].mxu0
  %v279 = vpop.f32.mrb[0].mxu0
  %280 = vdwg.mxu0
  %v281 = vadd.f32 %v126, %v276
  %v282 = vxor.u32 %v281, 2147483648
  %v283 = vmul.f32 %v282, 1.442695
  %v284 = vpow.pop %v283
  %v285 = vadd.f32 %v284, 1.0
  %v286 = vrcp.pop %v285
  %v287 = vmul.f32 1.0, %v286
  %v288 = vmul.f32 %v287, 2.0
  %v289 = vsub.f32 %v288, 1.0
  %v290 = vmul.f32 %v287, %v227
  %292 = vrot.lane.b32.xlu0 %v289, 64
  %v293 = vpop.permute.xlu0 %292
  %v295 = vmul.f32 %v287, %v293
  %297 = vrot.lane.b32.xlu0 %v295, 32
  %v298 = vpop.permute.xlu0 %297
  %v300 = vadd.f32 %v290, %v298
  %v301 = vtanh.pop %v300
  %303 = vrot.lane.b32.xlu0 %v301, 64
  %v304 = vpop.permute.xlu0 %303
  %v306 = vmul.f32 %v287, %v304
  %308 = vrot.lane.b32.xlu0 %v233, 32
  %v309 = vpop.permute.xlu0 %308
  %v311 = vsel %vm75, %v309, 0.0
  %v312 = vpack.c.bf16 %v311, %v311
  %v313 = vlaneseq
  %v314 = vshrl.u32 %v313, 7
  %v315 = vsub.s32 0, %v314
  %v316 = vrot.slane %v35, %v315
  %v325 = vunpack.c.l.b16 %v26
  %v326 = vunpack.c.l.b16 %v27
  %v327 = vunpack.c.l.b16 %v28
  %v328 = vunpack.c.l.b16 %v29
  %v329 = vunpack.c.l.b16 %v30
  %v330 = vunpack.c.l.b16 %v31
  %v331 = vunpack.c.l.b16 %v32
  %v332 = vunpack.c.l.b16 %v33
  %v333 = vpack.c.b16 %v326, %v325
  %v334 = vpack.c.b16 %v328, %v327
  %v335 = vpack.c.b16 %v330, %v329
  %v336 = vpack.c.b16 %v332, %v331
  %vm341 = vcmask 523264
  %v343 = vsel %vm341, %v312, 0
  %345 = vmatprep.subr.bf16.mxu0 0
  %346 = vmatpush1.bf16.msra.mxu0 %v333
  %347 = vmatprep.subr.bf16.mxu0 0
  %348 = vmatpush1.bf16.msra.mxu0 %v334
  %349 = vmatprep.subr.bf16.mxu0 0
  %350 = vmatpush1.bf16.msra.mxu0 %v335
  %351 = vmatprep.subr.bf16.mxu0 0
  %352 = vmatpush1.bf16.msra.mxu0 %v336
  %353 = vmatprep.subr.bf16.mxu0 0
  %354 = vmatpush1.bf16.msra.mxu0 0
  %355 = vmatprep.subr.bf16.mxu0 0
  %356 = vmatpush1.bf16.msra.mxu0 0
  %357 = vmatprep.subr.bf16.mxu0 0
  %358 = vmatpush1.bf16.msra.mxu0 0
  %359 = vmatprep.subr.bf16.mxu0 0
  %360 = vmatpush1.bf16.msra.mxu0 0
  %361 = vmatprep.subr.bf16.mxu0 0
  %362 = vmatpush1.bf16.msra.mxu0 0
  %363 = vmatprep.subr.bf16.mxu0 0
  %364 = vmatpush1.bf16.msra.mxu0 0
  %365 = vmatprep.subr.bf16.mxu0 0
  %366 = vmatpush1.bf16.msra.mxu0 0
  %367 = vmatprep.subr.bf16.mxu0 0
  %368 = vmatpush1.bf16.msra.mxu0 0
  %369 = vmatprep.subr.bf16.mxu0 0
  %370 = vmatpush1.bf16.msra.mxu0 0
  %371 = vmatprep.subr.bf16.mxu0 0
  %372 = vmatpush1.bf16.msra.mxu0 0
  %373 = vmatprep.subr.bf16.mxu0 0
  %374 = vmatpush1.bf16.msra.mxu0 0
  %375 = vmatprep.subr.bf16.mxu0 0
  %376 = vmatpush1.bf16.msra.mxu0 0
  %377 = vmatprep.mubr.bf16.mxu0 0
  %378 = vmatmul.mubr.bf16.gmra.mrb[0].mxu0 %v343
  %v379 = vpop.f32.mrb[0].mxu0
  %v380 = vadd.f32 %v316, %v379
  %v381 = vpop.f32.mrb[0].mxu0
  %v382 = vpop.f32.mrb[0].mxu0
  %v383 = vpop.f32.mrb[0].mxu0
  %384 = vdwg.mxu0
  %v385 = vxor.u32 %v380, 2147483648
  %v386 = vmul.f32 %v385, 1.442695
  %v387 = vpow.pop %v386
  %v388 = vadd.f32 %v387, 1.0
  %v389 = vrcp.pop %v388
  %v390 = vmul.f32 1.0, %v389
  %v391 = vmul.f32 %v390, 2.0
  %v392 = vsub.f32 %v391, 1.0
  %v393 = vmul.f32 %v390, 0.0
  %395 = vrot.lane.b32.xlu0 %v392, 64
  %v396 = vpop.permute.xlu0 %395
  %v398 = vmul.f32 %v390, %v396
  %400 = vrot.lane.b32.xlu0 %v398, 32
  %v401 = vpop.permute.xlu0 %400
  %v403 = vadd.f32 %v393, %v401
  %v404 = vtanh.pop %v403
  %406 = vrot.lane.b32.xlu0 %v404, 64
  %v407 = vpop.permute.xlu0 %406
  %v409 = vmul.f32 %v390, %v407
  %v410 = vpack.c.bf16 %v306, %v306
  %412 = vrot.lane.b32.xlu0 %v410, 32
  %v413 = vpop.permute.xlu0 %412
  %v415 = vsel %vm75, %v413, 0
  %417 = vmatprep.subr.bf16.mxu0 0
  %418 = vmatpush1.bf16.msra.mxu0 %v161
  %419 = vmatprep.subr.bf16.mxu0 0
  %420 = vmatpush1.bf16.msra.mxu0 %v162
  %421 = vmatprep.subr.bf16.mxu0 0
  %422 = vmatpush1.bf16.msra.mxu0 0
  %423 = vmatprep.subr.bf16.mxu0 0
  %424 = vmatpush1.bf16.msra.mxu0 0
  %425 = vmatprep.subr.bf16.mxu0 0
  %426 = vmatpush1.bf16.msra.mxu0 0
  %427 = vmatprep.subr.bf16.mxu0 0
  %428 = vmatpush1.bf16.msra.mxu0 0
  %429 = vmatprep.subr.bf16.mxu0 0
  %430 = vmatpush1.bf16.msra.mxu0 0
  %431 = vmatprep.subr.bf16.mxu0 0
  %432 = vmatpush1.bf16.msra.mxu0 0
  %433 = vmatprep.subr.bf16.mxu0 0
  %434 = vmatpush1.bf16.msra.mxu0 0
  %435 = vmatprep.subr.bf16.mxu0 0
  %436 = vmatpush1.bf16.msra.mxu0 0
  %437 = vmatprep.subr.bf16.mxu0 0
  %438 = vmatpush1.bf16.msra.mxu0 0
  %439 = vmatprep.subr.bf16.mxu0 0
  %440 = vmatpush1.bf16.msra.mxu0 0
  %441 = vmatprep.subr.bf16.mxu0 0
  %442 = vmatpush1.bf16.msra.mxu0 0
  %443 = vmatprep.subr.bf16.mxu0 0
  %444 = vmatpush1.bf16.msra.mxu0 0
  %445 = vmatprep.subr.bf16.mxu0 0
  %446 = vmatpush1.bf16.msra.mxu0 0
  %447 = vmatprep.subr.bf16.mxu0 0
  %448 = vmatpush1.bf16.msra.mxu0 0
  %449 = vmatprep.mubr.bf16.mxu0 0
  %450 = vmatmul.mubr.bf16.gmra.mrb[0].mxu0 %v415
  %v451 = vpop.f32.mrb[0].mxu0
  %v452 = vadd.f32 0.0, %v451
  %v453 = vpop.f32.mrb[0].mxu0
  %v454 = vpop.f32.mrb[0].mxu0
  %v455 = vpop.f32.mrb[0].mxu0
  %456 = vdwg.mxu0
  %v457 = vadd.f32 %v131, %v452
  %v458 = vxor.u32 %v457, 2147483648
  %v459 = vmul.f32 %v458, 1.442695
  %v460 = vpow.pop %v459
  %v461 = vadd.f32 %v460, 1.0
  %v462 = vrcp.pop %v461
  %v463 = vmul.f32 1.0, %v462
  %v464 = vmul.f32 %v463, 2.0
  %v465 = vsub.f32 %v464, 1.0
  %v466 = vmul.f32 %v463, %v300
  %468 = vrot.lane.b32.xlu0 %v465, 64
  %v469 = vpop.permute.xlu0 %468
  %v471 = vmul.f32 %v463, %v469
  %473 = vrot.lane.b32.xlu0 %v471, 32
  %v474 = vpop.permute.xlu0 %473
  %v476 = vadd.f32 %v466, %v474
  %v477 = vtanh.pop %v476
  %479 = vrot.lane.b32.xlu0 %v477, 64
  %v480 = vpop.permute.xlu0 %479
  %v482 = vmul.f32 %v463, %v480
  %484 = vrot.lane.b32.xlu0 %v306, 32
  %v485 = vpop.permute.xlu0 %484
  %488 = vrot.lane.b32.xlu0 %v409, 64
  %v489 = vpop.permute.xlu0 %488
  %v491 = vsel %vm75, %v485, %v489
  %v492 = vpack.c.bf16 %v491, %v491
  %v494 = vsel %vm341, %v492, 0
  %496 = vmatprep.subr.bf16.mxu0 0
  %497 = vmatpush1.bf16.msra.mxu0 %v333
  %498 = vmatprep.subr.bf16.mxu0 0
  %499 = vmatpush1.bf16.msra.mxu0 %v334
  %500 = vmatprep.subr.bf16.mxu0 0
  %501 = vmatpush1.bf16.msra.mxu0 %v335
  %502 = vmatprep.subr.bf16.mxu0 0
  %503 = vmatpush1.bf16.msra.mxu0 %v336
  %504 = vmatprep.subr.bf16.mxu0 0
  %505 = vmatpush1.bf16.msra.mxu0 0
  %506 = vmatprep.subr.bf16.mxu0 0
  %507 = vmatpush1.bf16.msra.mxu0 0
  %508 = vmatprep.subr.bf16.mxu0 0
  %509 = vmatpush1.bf16.msra.mxu0 0
  %510 = vmatprep.subr.bf16.mxu0 0
  %511 = vmatpush1.bf16.msra.mxu0 0
  %512 = vmatprep.subr.bf16.mxu0 0
  %513 = vmatpush1.bf16.msra.mxu0 0
  %514 = vmatprep.subr.bf16.mxu0 0
  %515 = vmatpush1.bf16.msra.mxu0 0
  %516 = vmatprep.subr.bf16.mxu0 0
  %517 = vmatpush1.bf16.msra.mxu0 0
  %518 = vmatprep.subr.bf16.mxu0 0
  %519 = vmatpush1.bf16.msra.mxu0 0
  %520 = vmatprep.subr.bf16.mxu0 0
  %521 = vmatpush1.bf16.msra.mxu0 0
  %522 = vmatprep.subr.bf16.mxu0 0
  %523 = vmatpush1.bf16.msra.mxu0 0
  %524 = vmatprep.subr.bf16.mxu0 0
  %525 = vmatpush1.bf16.msra.mxu0 0
  %526 = vmatprep.subr.bf16.mxu0 0
  %527 = vmatpush1.bf16.msra.mxu0 0
  %528 = vmatprep.mubr.bf16.mxu0 0
  %529 = vmatmul.mubr.bf16.gmra.mrb[0].mxu0 %v494
  %v530 = vpop.f32.mrb[0].mxu0
  %v531 = vadd.f32 %v316, %v530
  %v532 = vpop.f32.mrb[0].mxu0
  %v533 = vpop.f32.mrb[0].mxu0
  %v534 = vpop.f32.mrb[0].mxu0
  %535 = vdwg.mxu0
  %v536 = vxor.u32 %v531, 2147483648
  %v537 = vmul.f32 %v536, 1.442695
  %v538 = vpow.pop %v537
  %v539 = vadd.f32 %v538, 1.0
  %v540 = vrcp.pop %v539
  %v541 = vmul.f32 1.0, %v540
  %v542 = vmul.f32 %v541, 2.0
  %v543 = vsub.f32 %v542, 1.0
  %v544 = vmul.f32 %v541, %v403
  %546 = vrot.lane.b32.xlu0 %v543, 64
  %v547 = vpop.permute.xlu0 %546
  %v549 = vmul.f32 %v541, %v547
  %551 = vrot.lane.b32.xlu0 %v549, 32
  %v552 = vpop.permute.xlu0 %551
  %v554 = vadd.f32 %v544, %v552
  %v555 = vtanh.pop %v554
  %557 = vrot.lane.b32.xlu0 %v555, 64
  %v558 = vpop.permute.xlu0 %557
  %v560 = vmul.f32 %v541, %v558
  %561 = vrot.lane.b32.xlu0 %v409, 32
  %v562 = vpop.permute.xlu0 %561
  %v564 = vsel %vm75, %v562, 0.0
  %v565 = vpack.c.bf16 %v564, %v564
  %v566 = vlaneseq
  %v567 = vshrl.u32 %v566, 7
  %v568 = vsub.s32 0, %v567
  %v569 = vrot.slane %v46, %v568
  %v578 = vunpack.c.l.b16 %v37
  %v579 = vunpack.c.l.b16 %v38
  %v580 = vunpack.c.l.b16 %v39
  %v581 = vunpack.c.l.b16 %v40
  %v582 = vunpack.c.l.b16 %v41
  %v583 = vunpack.c.l.b16 %v42
  %v584 = vunpack.c.l.b16 %v43
  %v585 = vunpack.c.l.b16 %v44
  %v586 = vpack.c.b16 %v579, %v578
  %v587 = vpack.c.b16 %v581, %v580
  %v588 = vpack.c.b16 %v583, %v582
  %v589 = vpack.c.b16 %v585, %v584
  %v595 = vsel %vm341, %v565, 0
  %597 = vmatprep.subr.bf16.mxu0 0
  %598 = vmatpush1.bf16.msra.mxu0 %v586
  %599 = vmatprep.subr.bf16.mxu0 0
  %600 = vmatpush1.bf16.msra.mxu0 %v587
  %601 = vmatprep.subr.bf16.mxu0 0
  %602 = vmatpush1.bf16.msra.mxu0 %v588
  %603 = vmatprep.subr.bf16.mxu0 0
  %604 = vmatpush1.bf16.msra.mxu0 %v589
  %605 = vmatprep.subr.bf16.mxu0 0
  %606 = vmatpush1.bf16.msra.mxu0 0
  %607 = vmatprep.subr.bf16.mxu0 0
  %608 = vmatpush1.bf16.msra.mxu0 0
  %609 = vmatprep.subr.bf16.mxu0 0
  %610 = vmatpush1.bf16.msra.mxu0 0
  %611 = vmatprep.subr.bf16.mxu0 0
  %612 = vmatpush1.bf16.msra.mxu0 0
  %613 = vmatprep.subr.bf16.mxu0 0
  %614 = vmatpush1.bf16.msra.mxu0 0
  %615 = vmatprep.subr.bf16.mxu0 0
  %616 = vmatpush1.bf16.msra.mxu0 0
  %617 = vmatprep.subr.bf16.mxu0 0
  %618 = vmatpush1.bf16.msra.mxu0 0
  %619 = vmatprep.subr.bf16.mxu0 0
  %620 = vmatpush1.bf16.msra.mxu0 0
  %621 = vmatprep.subr.bf16.mxu0 0
  %622 = vmatpush1.bf16.msra.mxu0 0
  %623 = vmatprep.subr.bf16.mxu0 0
  %624 = vmatpush1.bf16.msra.mxu0 0
  %625 = vmatprep.subr.bf16.mxu0 0
  %626 = vmatpush1.bf16.msra.mxu0 0
  %627 = vmatprep.subr.bf16.mxu0 0
  %628 = vmatpush1.bf16.msra.mxu0 0
  %629 = vmatprep.mubr.bf16.mxu0 0
  %630 = vmatmul.mubr.bf16.gmra.mrb[0].mxu0 %v595
  %v631 = vpop.f32.mrb[0].mxu0
  %v632 = vadd.f32 %v569, %v631
  %v633 = vpop.f32.mrb[0].mxu0
  %v634 = vpop.f32.mrb[0].mxu0
  %v635 = vpop.f32.mrb[0].mxu0
  %636 = vdwg.mxu0
  %v637 = vxor.u32 %v632, 2147483648
  %v638 = vmul.f32 %v637, 1.442695
  %v639 = vpow.pop %v638
  %v640 = vadd.f32 %v639, 1.0
  %v641 = vrcp.pop %v640
  %v642 = vmul.f32 1.0, %v641
  %v643 = vmul.f32 %v642, 2.0
  %v644 = vsub.f32 %v643, 1.0
  %v645 = vmul.f32 %v642, 0.0
  %647 = vrot.lane.b32.xlu0 %v644, 64
  %v648 = vpop.permute.xlu0 %647
  %v650 = vmul.f32 %v642, %v648
  %652 = vrot.lane.b32.xlu0 %v650, 32
  %v653 = vpop.permute.xlu0 %652
  %v655 = vadd.f32 %v645, %v653
  %v656 = vtanh.pop %v655
  %658 = vrot.lane.b32.xlu0 %v656, 64
  %v659 = vpop.permute.xlu0 %658
  %v661 = vmul.f32 %v642, %v659
  %v662 = vpack.c.bf16 %v482, %v482
  %664 = vrot.lane.b32.xlu0 %v662, 32
  %v665 = vpop.permute.xlu0 %664
  %v667 = vsel %vm75, %v665, 0
  %669 = vmatprep.subr.bf16.mxu0 0
  %670 = vmatpush1.bf16.msra.mxu0 %v161
  %671 = vmatprep.subr.bf16.mxu0 0
  %672 = vmatpush1.bf16.msra.mxu0 %v162
  %673 = vmatprep.subr.bf16.mxu0 0
  %674 = vmatpush1.bf16.msra.mxu0 0
  %675 = vmatprep.subr.bf16.mxu0 0
  %676 = vmatpush1.bf16.msra.mxu0 0
  %677 = vmatprep.subr.bf16.mxu0 0
  %678 = vmatpush1.bf16.msra.mxu0 0
  %679 = vmatprep.subr.bf16.mxu0 0
  %680 = vmatpush1.bf16.msra.mxu0 0
  %681 = vmatprep.subr.bf16.mxu0 0
  %682 = vmatpush1.bf16.msra.mxu0 0
  %683 = vmatprep.subr.bf16.mxu0 0
  %684 = vmatpush1.bf16.msra.mxu0 0
  %685 = vmatprep.subr.bf16.mxu0 0
  %686 = vmatpush1.bf16.msra.mxu0 0
  %687 = vmatprep.subr.bf16.mxu0 0
  %688 = vmatpush1.bf16.msra.mxu0 0
  %689 = vmatprep.subr.bf16.mxu0 0
  %690 = vmatpush1.bf16.msra.mxu0 0
  %691 = vmatprep.subr.bf16.mxu0 0
  %692 = vmatpush1.bf16.msra.mxu0 0
  %693 = vmatprep.subr.bf16.mxu0 0
  %694 = vmatpush1.bf16.msra.mxu0 0
  %695 = vmatprep.subr.bf16.mxu0 0
  %696 = vmatpush1.bf16.msra.mxu0 0
  %697 = vmatprep.subr.bf16.mxu0 0
  %698 = vmatpush1.bf16.msra.mxu0 0
  %699 = vmatprep.subr.bf16.mxu0 0
  %700 = vmatpush1.bf16.msra.mxu0 0
  %701 = vmatprep.mubr.bf16.mxu0 0
  %702 = vmatmul.mubr.bf16.gmra.mrb[0].mxu0 %v667
  %v703 = vpop.f32.mrb[0].mxu0
  %v704 = vadd.f32 0.0, %v703
  %v705 = vpop.f32.mrb[0].mxu0
  %v706 = vpop.f32.mrb[0].mxu0
  %v707 = vpop.f32.mrb[0].mxu0
  %708 = vdwg.mxu0
  %v709 = vadd.f32 %v134, %v704
  %v710 = vxor.u32 %v709, 2147483648
  %v711 = vmul.f32 %v710, 1.442695
  %v712 = vpow.pop %v711
  %v713 = vadd.f32 %v712, 1.0
  %v714 = vrcp.pop %v713
  %v715 = vmul.f32 1.0, %v714
  %v716 = vmul.f32 %v715, 2.0
  %v717 = vsub.f32 %v716, 1.0
  %v718 = vmul.f32 %v715, %v476
  %720 = vrot.lane.b32.xlu0 %v717, 64
  %v721 = vpop.permute.xlu0 %720
  %v723 = vmul.f32 %v715, %v721
  %725 = vrot.lane.b32.xlu0 %v723, 32
  %v726 = vpop.permute.xlu0 %725
  %v728 = vadd.f32 %v718, %v726
  %v729 = vtanh.pop %v728
  %731 = vrot.lane.b32.xlu0 %v729, 64
  %v732 = vpop.permute.xlu0 %731
  %v734 = vmul.f32 %v715, %v732
  %736 = vrot.lane.b32.xlu0 %v482, 32
  %v737 = vpop.permute.xlu0 %736
  %740 = vrot.lane.b32.xlu0 %v560, 64
  %v741 = vpop.permute.xlu0 %740
  %v743 = vsel %vm75, %v737, %v741
  %v744 = vpack.c.bf16 %v743, %v743
  %v746 = vsel %vm341, %v744, 0
  %748 = vmatprep.subr.bf16.mxu0 0
  %749 = vmatpush1.bf16.msra.mxu0 %v333
  %750 = vmatprep.subr.bf16.mxu0 0
  %751 = vmatpush1.bf16.msra.mxu0 %v334
  %752 = vmatprep.subr.bf16.mxu0 0
  %753 = vmatpush1.bf16.msra.mxu0 %v335
  %754 = vmatprep.subr.bf16.mxu0 0
  %755 = vmatpush1.bf16.msra.mxu0 %v336
  %756 = vmatprep.subr.bf16.mxu0 0
  %757 = vmatpush1.bf16.msra.mxu0 0
  %758 = vmatprep.subr.bf16.mxu0 0
  %759 = vmatpush1.bf16.msra.mxu0 0
  %760 = vmatprep.subr.bf16.mxu0 0
  %761 = vmatpush1.bf16.msra.mxu0 0
  %762 = vmatprep.subr.bf16.mxu0 0
  %763 = vmatpush1.bf16.msra.mxu0 0
  %764 = vmatprep.subr.bf16.mxu0 0
  %765 = vmatpush1.bf16.msra.mxu0 0
  %766 = vmatprep.subr.bf16.mxu0 0
  %767 = vmatpush1.bf16.msra.mxu0 0
  %768 = vmatprep.subr.bf16.mxu0 0
  %769 = vmatpush1.bf16.msra.mxu0 0
  %770 = vmatprep.subr.bf16.mxu0 0
  %771 = vmatpush1.bf16.msra.mxu0 0
  %772 = vmatprep.subr.bf16.mxu0 0
  %773 = vmatpush1.bf16.msra.mxu0 0
  %774 = vmatprep.subr.bf16.mxu0 0
  %775 = vmatpush1.bf16.msra.mxu0 0
  %776 = vmatprep.subr.bf16.mxu0 0
  %777 = vmatpush1.bf16.msra.mxu0 0
  %778 = vmatprep.subr.bf16.mxu0 0
  %779 = vmatpush1.bf16.msra.mxu0 0
  %780 = vmatprep.mubr.bf16.mxu0 0
  %781 = vmatmul.mubr.bf16.gmra.mrb[0].mxu0 %v746
  %v782 = vpop.f32.mrb[0].mxu0
  %v783 = vadd.f32 %v316, %v782
  %v784 = vpop.f32.mrb[0].mxu0
  %v785 = vpop.f32.mrb[0].mxu0
  %v786 = vpop.f32.mrb[0].mxu0
  %787 = vdwg.mxu0
  %v788 = vxor.u32 %v783, 2147483648
  %v789 = vmul.f32 %v788, 1.442695
  %v790 = vpow.pop %v789
  %v791 = vadd.f32 %v790, 1.0
  %v792 = vrcp.pop %v791
  %v793 = vmul.f32 1.0, %v792
  %v794 = vmul.f32 %v793, 2.0
  %v795 = vsub.f32 %v794, 1.0
  %v796 = vmul.f32 %v793, %v554
  %798 = vrot.lane.b32.xlu0 %v795, 64
  %v799 = vpop.permute.xlu0 %798
  %v801 = vmul.f32 %v793, %v799
  %803 = vrot.lane.b32.xlu0 %v801, 32
  %v804 = vpop.permute.xlu0 %803
  %v806 = vadd.f32 %v796, %v804
  %v807 = vtanh.pop %v806
  %809 = vrot.lane.b32.xlu0 %v807, 64
  %v810 = vpop.permute.xlu0 %809
  %v812 = vmul.f32 %v793, %v810
  %813 = vrot.lane.b32.xlu0 %v560, 32
  %v814 = vpop.permute.xlu0 %813
  %817 = vrot.lane.b32.xlu0 %v661, 64
  %v818 = vpop.permute.xlu0 %817
  %v820 = vsel %vm75, %v814, %v818
  %v821 = vpack.c.bf16 %v820, %v820
  %v823 = vsel %vm341, %v821, 0
  %825 = vmatprep.subr.bf16.mxu0 0
  %826 = vmatpush1.bf16.msra.mxu0 %v586
  %827 = vmatprep.subr.bf16.mxu0 0
  %828 = vmatpush1.bf16.msra.mxu0 %v587
  %829 = vmatprep.subr.bf16.mxu0 0
  %830 = vmatpush1.bf16.msra.mxu0 %v588
  %831 = vmatprep.subr.bf16.mxu0 0
  %832 = vmatpush1.bf16.msra.mxu0 %v589
  %833 = vmatprep.subr.bf16.mxu0 0
  %834 = vmatpush1.bf16.msra.mxu0 0
  %835 = vmatprep.subr.bf16.mxu0 0
  %836 = vmatpush1.bf16.msra.mxu0 0
  %837 = vmatprep.subr.bf16.mxu0 0
  %838 = vmatpush1.bf16.msra.mxu0 0
  %839 = vmatprep.subr.bf16.mxu0 0
  %840 = vmatpush1.bf16.msra.mxu0 0
  %841 = vmatprep.subr.bf16.mxu0 0
  %842 = vmatpush1.bf16.msra.mxu0 0
  %843 = vmatprep.subr.bf16.mxu0 0
  %844 = vmatpush1.bf16.msra.mxu0 0
  %845 = vmatprep.subr.bf16.mxu0 0
  %846 = vmatpush1.bf16.msra.mxu0 0
  %847 = vmatprep.subr.bf16.mxu0 0
  %848 = vmatpush1.bf16.msra.mxu0 0
  %849 = vmatprep.subr.bf16.mxu0 0
  %850 = vmatpush1.bf16.msra.mxu0 0
  %851 = vmatprep.subr.bf16.mxu0 0
  %852 = vmatpush1.bf16.msra.mxu0 0
  %853 = vmatprep.subr.bf16.mxu0 0
  %854 = vmatpush1.bf16.msra.mxu0 0
  %855 = vmatprep.subr.bf16.mxu0 0
  %856 = vmatpush1.bf16.msra.mxu0 0
  %857 = vmatprep.mubr.bf16.mxu0 0
  %858 = vmatmul.mubr.bf16.gmra.mrb[0].mxu0 %v823
  %v859 = vpop.f32.mrb[0].mxu0
  %v860 = vadd.f32 %v569, %v859
  %v861 = vpop.f32.mrb[0].mxu0
  %v862 = vpop.f32.mrb[0].mxu0
  %v863 = vpop.f32.mrb[0].mxu0
  %864 = vdwg.mxu0
  %v865 = vxor.u32 %v860, 2147483648
  %v866 = vmul.f32 %v865, 1.442695
  %v867 = vpow.pop %v866
  %v868 = vadd.f32 %v867, 1.0
  %v869 = vrcp.pop %v868
  %v870 = vmul.f32 1.0, %v869
  %v871 = vmul.f32 %v870, 2.0
  %v872 = vsub.f32 %v871, 1.0
  %v873 = vmul.f32 %v870, %v655
  %875 = vrot.lane.b32.xlu0 %v872, 64
  %v876 = vpop.permute.xlu0 %875
  %v878 = vmul.f32 %v870, %v876
  %880 = vrot.lane.b32.xlu0 %v878, 32
  %v881 = vpop.permute.xlu0 %880
  %v883 = vadd.f32 %v873, %v881
  %v884 = vtanh.pop %v883
  %886 = vrot.lane.b32.xlu0 %v884, 64
  %v887 = vpop.permute.xlu0 %886
  %v889 = vmul.f32 %v870, %v887
  %v890 = vpack.c.bf16 %v734, %v734
  %892 = vrot.lane.b32.xlu0 %v890, 32
  %v893 = vpop.permute.xlu0 %892
  %v895 = vsel %vm75, %v893, 0
  %897 = vmatprep.subr.bf16.mxu0 0
  %898 = vmatpush1.bf16.msra.mxu0 %v161
  %899 = vmatprep.subr.bf16.mxu0 0
  %900 = vmatpush1.bf16.msra.mxu0 %v162
  %901 = vmatprep.subr.bf16.mxu0 0
  %902 = vmatpush1.bf16.msra.mxu0 0
  %903 = vmatprep.subr.bf16.mxu0 0
  %904 = vmatpush1.bf16.msra.mxu0 0
  %905 = vmatprep.subr.bf16.mxu0 0
  %906 = vmatpush1.bf16.msra.mxu0 0
  %907 = vmatprep.subr.bf16.mxu0 0
  %908 = vmatpush1.bf16.msra.mxu0 0
  %909 = vmatprep.subr.bf16.mxu0 0
  %910 = vmatpush1.bf16.msra.mxu0 0
  %911 = vmatprep.subr.bf16.mxu0 0
  %912 = vmatpush1.bf16.msra.mxu0 0
  %913 = vmatprep.subr.bf16.mxu0 0
  %914 = vmatpush1.bf16.msra.mxu0 0
  %915 = vmatprep.subr.bf16.mxu0 0
  %916 = vmatpush1.bf16.msra.mxu0 0
  %917 = vmatprep.subr.bf16.mxu0 0
  %918 = vmatpush1.bf16.msra.mxu0 0
  %919 = vmatprep.subr.bf16.mxu0 0
  %920 = vmatpush1.bf16.msra.mxu0 0
  %921 = vmatprep.subr.bf16.mxu0 0
  %922 = vmatpush1.bf16.msra.mxu0 0
  %923 = vmatprep.subr.bf16.mxu0 0
  %924 = vmatpush1.bf16.msra.mxu0 0
  %925 = vmatprep.subr.bf16.mxu0 0
  %926 = vmatpush1.bf16.msra.mxu0 0
  %927 = vmatprep.subr.bf16.mxu0 0
  %928 = vmatpush1.bf16.msra.mxu0 0
  %929 = vmatprep.mubr.bf16.mxu0 0
  %930 = vmatmul.mubr.bf16.gmra.mrb[0].mxu0 %v895
  %v931 = vpop.f32.mrb[0].mxu0
  %v932 = vadd.f32 0.0, %v931
  %v933 = vpop.f32.mrb[0].mxu0
  %v934 = vpop.f32.mrb[0].mxu0
  %v935 = vpop.f32.mrb[0].mxu0
  %936 = vdwg.mxu0
  %v937 = vadd.f32 %v139, %v932
  %v938 = vxor.u32 %v937, 2147483648
  %v939 = vmul.f32 %v938, 1.442695
  %v940 = vpow.pop %v939
  %v941 = vadd.f32 %v940, 1.0
  %v942 = vrcp.pop %v941
  %v943 = vmul.f32 1.0, %v942
  %v944 = vmul.f32 %v943, 2.0
  %v945 = vsub.f32 %v944, 1.0
  %v946 = vmul.f32 %v943, %v728
  %948 = vrot.lane.b32.xlu0 %v945, 64
  %v949 = vpop.permute.xlu0 %948
  %v951 = vmul.f32 %v943, %v949
  %953 = vrot.lane.b32.xlu0 %v951, 32
  %v954 = vpop.permute.xlu0 %953
  %v956 = vadd.f32 %v946, %v954
  %v957 = vtanh.pop %v956
  %959 = vrot.lane.b32.xlu0 %v957, 64
  %v960 = vpop.permute.xlu0 %959
  %v962 = vmul.f32 %v943, %v960
  %964 = vrot.lane.b32.xlu0 %v734, 32
  %v965 = vpop.permute.xlu0 %964
  %968 = vrot.lane.b32.xlu0 %v812, 64
  %v969 = vpop.permute.xlu0 %968
  %v971 = vsel %vm75, %v965, %v969
  %v972 = vpack.c.bf16 %v971, %v971
  %v974 = vsel %vm341, %v972, 0
  %976 = vmatprep.subr.bf16.mxu0 0
  %977 = vmatpush1.bf16.msra.mxu0 %v333
  %978 = vmatprep.subr.bf16.mxu0 0
  %979 = vmatpush1.bf16.msra.mxu0 %v334
  %980 = vmatprep.subr.bf16.mxu0 0
  %981 = vmatpush1.bf16.msra.mxu0 %v335
  %982 = vmatprep.subr.bf16.mxu0 0
  %983 = vmatpush1.bf16.msra.mxu0 %v336
  %984 = vmatprep.subr.bf16.mxu0 0
  %985 = vmatpush1.bf16.msra.mxu0 0
  %986 = vmatprep.subr.bf16.mxu0 0
  %987 = vmatpush1.bf16.msra.mxu0 0
  %988 = vmatprep.subr.bf16.mxu0 0
  %989 = vmatpush1.bf16.msra.mxu0 0
  %990 = vmatprep.subr.bf16.mxu0 0
  %991 = vmatpush1.bf16.msra.mxu0 0
  %992 = vmatprep.subr.bf16.mxu0 0
  %993 = vmatpush1.bf16.msra.mxu0 0
  %994 = vmatprep.subr.bf16.mxu0 0
  %995 = vmatpush1.bf16.msra.mxu0 0
  %996 = vmatprep.subr.bf16.mxu0 0
  %997 = vmatpush1.bf16.msra.mxu0 0
  %998 = vmatprep.subr.bf16.mxu0 0
  %999 = vmatpush1.bf16.msra.mxu0 0
  %1000 = vmatprep.subr.bf16.mxu0 0
  %1001 = vmatpush1.bf16.msra.mxu0 0
  %1002 = vmatprep.subr.bf16.mxu0 0
  %1003 = vmatpush1.bf16.msra.mxu0 0
  %1004 = vmatprep.subr.bf16.mxu0 0
  %1005 = vmatpush1.bf16.msra.mxu0 0
  %1006 = vmatprep.subr.bf16.mxu0 0
  %1007 = vmatpush1.bf16.msra.mxu0 0
  %1008 = vmatprep.mubr.bf16.mxu0 0
  %1009 = vmatmul.mubr.bf16.gmra.mrb[0].mxu0 %v974
  %v1010 = vpop.f32.mrb[0].mxu0
  %v1011 = vadd.f32 %v316, %v1010
  %v1012 = vpop.f32.mrb[0].mxu0
  %v1013 = vpop.f32.mrb[0].mxu0
  %v1014 = vpop.f32.mrb[0].mxu0
  %1015 = vdwg.mxu0
  %v1016 = vxor.u32 %v1011, 2147483648
  %v1017 = vmul.f32 %v1016, 1.442695
  %v1018 = vpow.pop %v1017
  %v1019 = vadd.f32 %v1018, 1.0
  %v1020 = vrcp.pop %v1019
  %v1021 = vmul.f32 1.0, %v1020
  %v1022 = vmul.f32 %v1021, 2.0
  %v1023 = vsub.f32 %v1022, 1.0
  %v1024 = vmul.f32 %v1021, %v806
  %1026 = vrot.lane.b32.xlu0 %v1023, 64
  %v1027 = vpop.permute.xlu0 %1026
  %v1029 = vmul.f32 %v1021, %v1027
  %1031 = vrot.lane.b32.xlu0 %v1029, 32
  %v1032 = vpop.permute.xlu0 %1031
  %v1034 = vadd.f32 %v1024, %v1032
  %v1035 = vtanh.pop %v1034
  %1037 = vrot.lane.b32.xlu0 %v1035, 64
  %v1038 = vpop.permute.xlu0 %1037
  %v1040 = vmul.f32 %v1021, %v1038
  %1041 = vrot.lane.b32.xlu0 %v812, 32
  %v1042 = vpop.permute.xlu0 %1041
  %1045 = vrot.lane.b32.xlu0 %v889, 64
  %v1046 = vpop.permute.xlu0 %1045
  %v1048 = vsel %vm75, %v1042, %v1046
  %v1049 = vpack.c.bf16 %v1048, %v1048
  %v1051 = vsel %vm341, %v1049, 0
  %1053 = vmatprep.subr.bf16.mxu0 0
  %1054 = vmatpush1.bf16.msra.mxu0 %v586
  %1055 = vmatprep.subr.bf16.mxu0 0
  %1056 = vmatpush1.bf16.msra.mxu0 %v587
  %1057 = vmatprep.subr.bf16.mxu0 0
  %1058 = vmatpush1.bf16.msra.mxu0 %v588
  %1059 = vmatprep.subr.bf16.mxu0 0
  %1060 = vmatpush1.bf16.msra.mxu0 %v589
  %1061 = vmatprep.subr.bf16.mxu0 0
  %1062 = vmatpush1.bf16.msra.mxu0 0
  %1063 = vmatprep.subr.bf16.mxu0 0
  %1064 = vmatpush1.bf16.msra.mxu0 0
  %1065 = vmatprep.subr.bf16.mxu0 0
  %1066 = vmatpush1.bf16.msra.mxu0 0
  %1067 = vmatprep.subr.bf16.mxu0 0
  %1068 = vmatpush1.bf16.msra.mxu0 0
  %1069 = vmatprep.subr.bf16.mxu0 0
  %1070 = vmatpush1.bf16.msra.mxu0 0
  %1071 = vmatprep.subr.bf16.mxu0 0
  %1072 = vmatpush1.bf16.msra.mxu0 0
  %1073 = vmatprep.subr.bf16.mxu0 0
  %1074 = vmatpush1.bf16.msra.mxu0 0
  %1075 = vmatprep.subr.bf16.mxu0 0
  %1076 = vmatpush1.bf16.msra.mxu0 0
  %1077 = vmatprep.subr.bf16.mxu0 0
  %1078 = vmatpush1.bf16.msra.mxu0 0
  %1079 = vmatprep.subr.bf16.mxu0 0
  %1080 = vmatpush1.bf16.msra.mxu0 0
  %1081 = vmatprep.subr.bf16.mxu0 0
  %1082 = vmatpush1.bf16.msra.mxu0 0
  %1083 = vmatprep.subr.bf16.mxu0 0
  %1084 = vmatpush1.bf16.msra.mxu0 0
  %1085 = vmatprep.mubr.bf16.mxu0 0
  %1086 = vmatmul.mubr.bf16.gmra.mrb[0].mxu0 %v1051
  %v1087 = vpop.f32.mrb[0].mxu0
  %v1088 = vadd.f32 %v569, %v1087
  %v1089 = vpop.f32.mrb[0].mxu0
  %v1090 = vpop.f32.mrb[0].mxu0
  %v1091 = vpop.f32.mrb[0].mxu0
  %1092 = vdwg.mxu0
  %v1093 = vxor.u32 %v1088, 2147483648
  %v1094 = vmul.f32 %v1093, 1.442695
  %v1095 = vpow.pop %v1094
  %v1096 = vadd.f32 %v1095, 1.0
  %v1097 = vrcp.pop %v1096
  %v1098 = vmul.f32 1.0, %v1097
  %v1099 = vmul.f32 %v1098, 2.0
  %v1100 = vsub.f32 %v1099, 1.0
  %v1101 = vmul.f32 %v1098, %v883
  %1103 = vrot.lane.b32.xlu0 %v1100, 64
  %v1104 = vpop.permute.xlu0 %1103
  %v1106 = vmul.f32 %v1098, %v1104
  %1108 = vrot.lane.b32.xlu0 %v1106, 32
  %v1109 = vpop.permute.xlu0 %1108
  %v1111 = vadd.f32 %v1101, %v1109
  %v1112 = vtanh.pop %v1111
  %1114 = vrot.lane.b32.xlu0 %v1112, 64
  %v1115 = vpop.permute.xlu0 %1114
  %v1117 = vmul.f32 %v1098, %v1115
  %v1118 = vpack.c.bf16 %v962, %v962
  %1120 = vrot.lane.b32.xlu0 %v1118, 32
  %v1121 = vpop.permute.xlu0 %1120
  %v1123 = vsel %vm75, %v1121, 0
  %1125 = vmatprep.subr.bf16.mxu0 0
  %1126 = vmatpush1.bf16.msra.mxu0 %v161
  %1127 = vmatprep.subr.bf16.mxu0 0
  %1128 = vmatpush1.bf16.msra.mxu0 %v162
  %1129 = vmatprep.subr.bf16.mxu0 0
  %1130 = vmatpush1.bf16.msra.mxu0 0
  %1131 = vmatprep.subr.bf16.mxu0 0
  %1132 = vmatpush1.bf16.msra.mxu0 0
  %1133 = vmatprep.subr.bf16.mxu0 0
  %1134 = vmatpush1.bf16.msra.mxu0 0
  %1135 = vmatprep.subr.bf16.mxu0 0
  %1136 = vmatpush1.bf16.msra.mxu0 0
  %1137 = vmatprep.subr.bf16.mxu0 0
  %1138 = vmatpush1.bf16.msra.mxu0 0
  %1139 = vmatprep.subr.bf16.mxu0 0
  %1140 = vmatpush1.bf16.msra.mxu0 0
  %1141 = vmatprep.subr.bf16.mxu0 0
  %1142 = vmatpush1.bf16.msra.mxu0 0
  %1143 = vmatprep.subr.bf16.mxu0 0
  %1144 = vmatpush1.bf16.msra.mxu0 0
  %1145 = vmatprep.subr.bf16.mxu0 0
  %1146 = vmatpush1.bf16.msra.mxu0 0
  %1147 = vmatprep.subr.bf16.mxu0 0
  %1148 = vmatpush1.bf16.msra.mxu0 0
  %1149 = vmatprep.subr.bf16.mxu0 0
  %1150 = vmatpush1.bf16.msra.mxu0 0
  %1151 = vmatprep.subr.bf16.mxu0 0
  %1152 = vmatpush1.bf16.msra.mxu0 0
  %1153 = vmatprep.subr.bf16.mxu0 0
  %1154 = vmatpush1.bf16.msra.mxu0 0
  %1155 = vmatprep.subr.bf16.mxu0 0
  %1156 = vmatpush1.bf16.msra.mxu0 0
  %1157 = vmatprep.mubr.bf16.mxu0 0
  %1158 = vmatmul.mubr.bf16.gmra.mrb[0].mxu0 %v1123
  %v1159 = vpop.f32.mrb[0].mxu0
  %v1160 = vadd.f32 0.0, %v1159
  %v1161 = vpop.f32.mrb[0].mxu0
  %v1162 = vpop.f32.mrb[0].mxu0
  %v1163 = vpop.f32.mrb[0].mxu0
  %1164 = vdwg.mxu0
  %v1165 = vadd.f32 %v142, %v1160
  %v1166 = vxor.u32 %v1165, 2147483648
  %v1167 = vmul.f32 %v1166, 1.442695
  %v1168 = vpow.pop %v1167
  %v1169 = vadd.f32 %v1168, 1.0
  %v1170 = vrcp.pop %v1169
  %v1171 = vmul.f32 1.0, %v1170
  %v1172 = vmul.f32 %v1171, 2.0
  %v1173 = vsub.f32 %v1172, 1.0
  %v1174 = vmul.f32 %v1171, %v956
  %1176 = vrot.lane.b32.xlu0 %v1173, 64
  %v1177 = vpop.permute.xlu0 %1176
  %v1179 = vmul.f32 %v1171, %v1177
  %1181 = vrot.lane.b32.xlu0 %v1179, 32
  %v1182 = vpop.permute.xlu0 %1181
  %v1184 = vadd.f32 %v1174, %v1182
  %v1185 = vtanh.pop %v1184
  %1187 = vrot.lane.b32.xlu0 %v1185, 64
  %v1188 = vpop.permute.xlu0 %1187
  %v1190 = vmul.f32 %v1171, %v1188
  %1192 = vrot.lane.b32.xlu0 %v962, 32
  %v1193 = vpop.permute.xlu0 %1192
  %1196 = vrot.lane.b32.xlu0 %v1040, 64
  %v1197 = vpop.permute.xlu0 %1196
  %v1199 = vsel %vm75, %v1193, %v1197
  %v1200 = vpack.c.bf16 %v1199, %v1199
  %v1202 = vsel %vm341, %v1200, 0
  %1204 = vmatprep.subr.bf16.mxu0 0
  %1205 = vmatpush1.bf16.msra.mxu0 %v333
  %1206 = vmatprep.subr.bf16.mxu0 0
  %1207 = vmatpush1.bf16.msra.mxu0 %v334
  %1208 = vmatprep.subr.bf16.mxu0 0
  %1209 = vmatpush1.bf16.msra.mxu0 %v335
  %1210 = vmatprep.subr.bf16.mxu0 0
  %1211 = vmatpush1.bf16.msra.mxu0 %v336
  %1212 = vmatprep.subr.bf16.mxu0 0
  %1213 = vmatpush1.bf16.msra.mxu0 0
  %1214 = vmatprep.subr.bf16.mxu0 0
  %1215 = vmatpush1.bf16.msra.mxu0 0
  %1216 = vmatprep.subr.bf16.mxu0 0
  %1217 = vmatpush1.bf16.msra.mxu0 0
  %1218 = vmatprep.subr.bf16.mxu0 0
  %1219 = vmatpush1.bf16.msra.mxu0 0
  %1220 = vmatprep.subr.bf16.mxu0 0
  %1221 = vmatpush1.bf16.msra.mxu0 0
  %1222 = vmatprep.subr.bf16.mxu0 0
  %1223 = vmatpush1.bf16.msra.mxu0 0
  %1224 = vmatprep.subr.bf16.mxu0 0
  %1225 = vmatpush1.bf16.msra.mxu0 0
  %1226 = vmatprep.subr.bf16.mxu0 0
  %1227 = vmatpush1.bf16.msra.mxu0 0
  %1228 = vmatprep.subr.bf16.mxu0 0
  %1229 = vmatpush1.bf16.msra.mxu0 0
  %1230 = vmatprep.subr.bf16.mxu0 0
  %1231 = vmatpush1.bf16.msra.mxu0 0
  %1232 = vmatprep.subr.bf16.mxu0 0
  %1233 = vmatpush1.bf16.msra.mxu0 0
  %1234 = vmatprep.subr.bf16.mxu0 0
  %1235 = vmatpush1.bf16.msra.mxu0 0
  %1236 = vmatprep.mubr.bf16.mxu0 0
  %1237 = vmatmul.mubr.bf16.gmra.mrb[0].mxu0 %v1202
  %v1238 = vpop.f32.mrb[0].mxu0
  %v1239 = vadd.f32 %v316, %v1238
  %v1240 = vpop.f32.mrb[0].mxu0
  %v1241 = vpop.f32.mrb[0].mxu0
  %v1242 = vpop.f32.mrb[0].mxu0
  %1243 = vdwg.mxu0
  %v1244 = vxor.u32 %v1239, 2147483648
  %v1245 = vmul.f32 %v1244, 1.442695
  %v1246 = vpow.pop %v1245
  %v1247 = vadd.f32 %v1246, 1.0
  %v1248 = vrcp.pop %v1247
  %v1249 = vmul.f32 1.0, %v1248
  %v1250 = vmul.f32 %v1249, 2.0
  %v1251 = vsub.f32 %v1250, 1.0
  %v1252 = vmul.f32 %v1249, %v1034
  %1254 = vrot.lane.b32.xlu0 %v1251, 64
  %v1255 = vpop.permute.xlu0 %1254
  %v1257 = vmul.f32 %v1249, %v1255
  %1259 = vrot.lane.b32.xlu0 %v1257, 32
  %v1260 = vpop.permute.xlu0 %1259
  %v1262 = vadd.f32 %v1252, %v1260
  %v1263 = vtanh.pop %v1262
  %1265 = vrot.lane.b32.xlu0 %v1263, 64
  %v1266 = vpop.permute.xlu0 %1265
  %v1268 = vmul.f32 %v1249, %v1266
  %1269 = vrot.lane.b32.xlu0 %v1040, 32
  %v1270 = vpop.permute.xlu0 %1269
  %1273 = vrot.lane.b32.xlu0 %v1117, 64
  %v1274 = vpop.permute.xlu0 %1273
  %v1276 = vsel %vm75, %v1270, %v1274
  %v1277 = vpack.c.bf16 %v1276, %v1276
  %v1279 = vsel %vm341, %v1277, 0
  %1281 = vmatprep.subr.bf16.mxu0 0
  %1282 = vmatpush1.bf16.msra.mxu0 %v586
  %1283 = vmatprep.subr.bf16.mxu0 0
  %1284 = vmatpush1.bf16.msra.mxu0 %v587
  %1285 = vmatprep.subr.bf16.mxu0 0
  %1286 = vmatpush1.bf16.msra.mxu0 %v588
  %1287 = vmatprep.subr.bf16.mxu0 0
  %1288 = vmatpush1.bf16.msra.mxu0 %v589
  %1289 = vmatprep.subr.bf16.mxu0 0
  %1290 = vmatpush1.bf16.msra.mxu0 0
  %1291 = vmatprep.subr.bf16.mxu0 0
  %1292 = vmatpush1.bf16.msra.mxu0 0
  %1293 = vmatprep.subr.bf16.mxu0 0
  %1294 = vmatpush1.bf16.msra.mxu0 0
  %1295 = vmatprep.subr.bf16.mxu0 0
  %1296 = vmatpush1.bf16.msra.mxu0 0
  %1297 = vmatprep.subr.bf16.mxu0 0
  %1298 = vmatpush1.bf16.msra.mxu0 0
  %1299 = vmatprep.subr.bf16.mxu0 0
  %1300 = vmatpush1.bf16.msra.mxu0 0
  %1301 = vmatprep.subr.bf16.mxu0 0
  %1302 = vmatpush1.bf16.msra.mxu0 0
  %1303 = vmatprep.subr.bf16.mxu0 0
  %1304 = vmatpush1.bf16.msra.mxu0 0
  %1305 = vmatprep.subr.bf16.mxu0 0
  %1306 = vmatpush1.bf16.msra.mxu0 0
  %1307 = vmatprep.subr.bf16.mxu0 0
  %1308 = vmatpush1.bf16.msra.mxu0 0
  %1309 = vmatprep.subr.bf16.mxu0 0
  %1310 = vmatpush1.bf16.msra.mxu0 0
  %1311 = vmatprep.subr.bf16.mxu0 0
  %1312 = vmatpush1.bf16.msra.mxu0 0
  %1313 = vmatprep.mubr.bf16.mxu0 0
  %1314 = vmatmul.mubr.bf16.gmra.mrb[0].mxu0 %v1279
  %v1315 = vpop.f32.mrb[0].mxu0
  %v1316 = vadd.f32 %v569, %v1315
  %v1317 = vpop.f32.mrb[0].mxu0
  %v1318 = vpop.f32.mrb[0].mxu0
  %v1319 = vpop.f32.mrb[0].mxu0
  %1320 = vdwg.mxu0
  %v1321 = vxor.u32 %v1316, 2147483648
  %v1322 = vmul.f32 %v1321, 1.442695
  %v1323 = vpow.pop %v1322
  %v1324 = vadd.f32 %v1323, 1.0
  %v1325 = vrcp.pop %v1324
  %v1326 = vmul.f32 1.0, %v1325
  %v1327 = vmul.f32 %v1326, 2.0
  %v1328 = vsub.f32 %v1327, 1.0
  %v1329 = vmul.f32 %v1326, %v1111
  %1331 = vrot.lane.b32.xlu0 %v1328, 64
  %v1332 = vpop.permute.xlu0 %1331
  %v1334 = vmul.f32 %v1326, %v1332
  %1336 = vrot.lane.b32.xlu0 %v1334, 32
  %v1337 = vpop.permute.xlu0 %1336
  %v1339 = vadd.f32 %v1329, %v1337
  %v1340 = vtanh.pop %v1339
  %1342 = vrot.lane.b32.xlu0 %v1340, 64
  %v1343 = vpop.permute.xlu0 %1342
  %v1345 = vmul.f32 %v1326, %v1343
  %v1346 = vpack.c.bf16 %v1190, %v1190
  %1348 = vrot.lane.b32.xlu0 %v1346, 32
  %v1349 = vpop.permute.xlu0 %1348
  %v1351 = vsel %vm75, %v1349, 0
  %1353 = vmatprep.subr.bf16.mxu0 0
  %1354 = vmatpush1.bf16.msra.mxu0 %v161
  %1355 = vmatprep.subr.bf16.mxu0 0
  %1356 = vmatpush1.bf16.msra.mxu0 %v162
  %1357 = vmatprep.subr.bf16.mxu0 0
  %1358 = vmatpush1.bf16.msra.mxu0 0
  %1359 = vmatprep.subr.bf16.mxu0 0
  %1360 = vmatpush1.bf16.msra.mxu0 0
  %1361 = vmatprep.subr.bf16.mxu0 0
  %1362 = vmatpush1.bf16.msra.mxu0 0
  %1363 = vmatprep.subr.bf16.mxu0 0
  %1364 = vmatpush1.bf16.msra.mxu0 0
  %1365 = vmatprep.subr.bf16.mxu0 0
  %1366 = vmatpush1.bf16.msra.mxu0 0
  %1367 = vmatprep.subr.bf16.mxu0 0
  %1368 = vmatpush1.bf16.msra.mxu0 0
  %1369 = vmatprep.subr.bf16.mxu0 0
  %1370 = vmatpush1.bf16.msra.mxu0 0
  %1371 = vmatprep.subr.bf16.mxu0 0
  %1372 = vmatpush1.bf16.msra.mxu0 0
  %1373 = vmatprep.subr.bf16.mxu0 0
  %1374 = vmatpush1.bf16.msra.mxu0 0
  %1375 = vmatprep.subr.bf16.mxu0 0
  %1376 = vmatpush1.bf16.msra.mxu0 0
  %1377 = vmatprep.subr.bf16.mxu0 0
  %1378 = vmatpush1.bf16.msra.mxu0 0
  %1379 = vmatprep.subr.bf16.mxu0 0
  %1380 = vmatpush1.bf16.msra.mxu0 0
  %1381 = vmatprep.subr.bf16.mxu0 0
  %1382 = vmatpush1.bf16.msra.mxu0 0
  %1383 = vmatprep.subr.bf16.mxu0 0
  %1384 = vmatpush1.bf16.msra.mxu0 0
  %1385 = vmatprep.mubr.bf16.mxu0 0
  %1386 = vmatmul.mubr.bf16.gmra.mrb[0].mxu0 %v1351
  %v1387 = vpop.f32.mrb[0].mxu0
  %v1388 = vadd.f32 0.0, %v1387
  %v1389 = vpop.f32.mrb[0].mxu0
  %v1390 = vpop.f32.mrb[0].mxu0
  %v1391 = vpop.f32.mrb[0].mxu0
  %1392 = vdwg.mxu0
  %v1393 = vadd.f32 %v147, %v1388
  %v1394 = vxor.u32 %v1393, 2147483648
  %v1395 = vmul.f32 %v1394, 1.442695
  %v1396 = vpow.pop %v1395
  %v1397 = vadd.f32 %v1396, 1.0
  %v1398 = vrcp.pop %v1397
  %v1399 = vmul.f32 1.0, %v1398
  %v1400 = vmul.f32 %v1399, 2.0
  %v1401 = vsub.f32 %v1400, 1.0
  %v1402 = vmul.f32 %v1399, %v1184
  %1404 = vrot.lane.b32.xlu0 %v1401, 64
  %v1405 = vpop.permute.xlu0 %1404
  %v1407 = vmul.f32 %v1399, %v1405
  %1409 = vrot.lane.b32.xlu0 %v1407, 32
  %v1410 = vpop.permute.xlu0 %1409
  %v1412 = vadd.f32 %v1402, %v1410
  %v1413 = vtanh.pop %v1412
  %1415 = vrot.lane.b32.xlu0 %v1413, 64
  %v1416 = vpop.permute.xlu0 %1415
  %v1418 = vmul.f32 %v1399, %v1416
  %1420 = vrot.lane.b32.xlu0 %v1190, 32
  %v1421 = vpop.permute.xlu0 %1420
  %1424 = vrot.lane.b32.xlu0 %v1268, 64
  %v1425 = vpop.permute.xlu0 %1424
  %v1427 = vsel %vm75, %v1421, %v1425
  %v1428 = vpack.c.bf16 %v1427, %v1427
  %v1430 = vsel %vm341, %v1428, 0
  %1432 = vmatprep.subr.bf16.mxu0 0
  %1433 = vmatpush1.bf16.msra.mxu0 %v333
  %1434 = vmatprep.subr.bf16.mxu0 0
  %1435 = vmatpush1.bf16.msra.mxu0 %v334
  %1436 = vmatprep.subr.bf16.mxu0 0
  %1437 = vmatpush1.bf16.msra.mxu0 %v335
  %1438 = vmatprep.subr.bf16.mxu0 0
  %1439 = vmatpush1.bf16.msra.mxu0 %v336
  %1440 = vmatprep.subr.bf16.mxu0 0
  %1441 = vmatpush1.bf16.msra.mxu0 0
  %1442 = vmatprep.subr.bf16.mxu0 0
  %1443 = vmatpush1.bf16.msra.mxu0 0
  %1444 = vmatprep.subr.bf16.mxu0 0
  %1445 = vmatpush1.bf16.msra.mxu0 0
  %1446 = vmatprep.subr.bf16.mxu0 0
  %1447 = vmatpush1.bf16.msra.mxu0 0
  %1448 = vmatprep.subr.bf16.mxu0 0
  %1449 = vmatpush1.bf16.msra.mxu0 0
  %1450 = vmatprep.subr.bf16.mxu0 0
  %1451 = vmatpush1.bf16.msra.mxu0 0
  %1452 = vmatprep.subr.bf16.mxu0 0
  %1453 = vmatpush1.bf16.msra.mxu0 0
  %1454 = vmatprep.subr.bf16.mxu0 0
  %1455 = vmatpush1.bf16.msra.mxu0 0
  %1456 = vmatprep.subr.bf16.mxu0 0
  %1457 = vmatpush1.bf16.msra.mxu0 0
  %1458 = vmatprep.subr.bf16.mxu0 0
  %1459 = vmatpush1.bf16.msra.mxu0 0
  %1460 = vmatprep.subr.bf16.mxu0 0
  %1461 = vmatpush1.bf16.msra.mxu0 0
  %1462 = vmatprep.subr.bf16.mxu0 0
  %1463 = vmatpush1.bf16.msra.mxu0 0
  %1464 = vmatprep.mubr.bf16.mxu0 0
  %1465 = vmatmul.mubr.bf16.gmra.mrb[0].mxu0 %v1430
  %v1466 = vpop.f32.mrb[0].mxu0
  %v1467 = vadd.f32 %v316, %v1466
  %v1468 = vpop.f32.mrb[0].mxu0
  %v1469 = vpop.f32.mrb[0].mxu0
  %v1470 = vpop.f32.mrb[0].mxu0
  %1471 = vdwg.mxu0
  %v1472 = vxor.u32 %v1467, 2147483648
  %v1473 = vmul.f32 %v1472, 1.442695
  %v1474 = vpow.pop %v1473
  %v1475 = vadd.f32 %v1474, 1.0
  %v1476 = vrcp.pop %v1475
  %v1477 = vmul.f32 1.0, %v1476
  %v1478 = vmul.f32 %v1477, 2.0
  %v1479 = vsub.f32 %v1478, 1.0
  %v1480 = vmul.f32 %v1477, %v1262
  %1482 = vrot.lane.b32.xlu0 %v1479, 64
  %v1483 = vpop.permute.xlu0 %1482
  %v1485 = vmul.f32 %v1477, %v1483
  %1487 = vrot.lane.b32.xlu0 %v1485, 32
  %v1488 = vpop.permute.xlu0 %1487
  %v1490 = vadd.f32 %v1480, %v1488
  %v1491 = vtanh.pop %v1490
  %1493 = vrot.lane.b32.xlu0 %v1491, 64
  %v1494 = vpop.permute.xlu0 %1493
  %v1496 = vmul.f32 %v1477, %v1494
  %1497 = vrot.lane.b32.xlu0 %v1268, 32
  %v1498 = vpop.permute.xlu0 %1497
  %1501 = vrot.lane.b32.xlu0 %v1345, 64
  %v1502 = vpop.permute.xlu0 %1501
  %v1504 = vsel %vm75, %v1498, %v1502
  %v1505 = vpack.c.bf16 %v1504, %v1504
  %v1507 = vsel %vm341, %v1505, 0
  %1509 = vmatprep.subr.bf16.mxu0 0
  %1510 = vmatpush1.bf16.msra.mxu0 %v586
  %1511 = vmatprep.subr.bf16.mxu0 0
  %1512 = vmatpush1.bf16.msra.mxu0 %v587
  %1513 = vmatprep.subr.bf16.mxu0 0
  %1514 = vmatpush1.bf16.msra.mxu0 %v588
  %1515 = vmatprep.subr.bf16.mxu0 0
  %1516 = vmatpush1.bf16.msra.mxu0 %v589
  %1517 = vmatprep.subr.bf16.mxu0 0
  %1518 = vmatpush1.bf16.msra.mxu0 0
  %1519 = vmatprep.subr.bf16.mxu0 0
  %1520 = vmatpush1.bf16.msra.mxu0 0
  %1521 = vmatprep.subr.bf16.mxu0 0
  %1522 = vmatpush1.bf16.msra.mxu0 0
  %1523 = vmatprep.subr.bf16.mxu0 0
  %1524 = vmatpush1.bf16.msra.mxu0 0
  %1525 = vmatprep.subr.bf16.mxu0 0
  %1526 = vmatpush1.bf16.msra.mxu0 0
  %1527 = vmatprep.subr.bf16.mxu0 0
  %1528 = vmatpush1.bf16.msra.mxu0 0
  %1529 = vmatprep.subr.bf16.mxu0 0
  %1530 = vmatpush1.bf16.msra.mxu0 0
  %1531 = vmatprep.subr.bf16.mxu0 0
  %1532 = vmatpush1.bf16.msra.mxu0 0
  %1533 = vmatprep.subr.bf16.mxu0 0
  %1534 = vmatpush1.bf16.msra.mxu0 0
  %1535 = vmatprep.subr.bf16.mxu0 0
  %1536 = vmatpush1.bf16.msra.mxu0 0
  %1537 = vmatprep.subr.bf16.mxu0 0
  %1538 = vmatpush1.bf16.msra.mxu0 0
  %1539 = vmatprep.subr.bf16.mxu0 0
  %1540 = vmatpush1.bf16.msra.mxu0 0
  %1541 = vmatprep.mubr.bf16.mxu0 0
  %1542 = vmatmul.mubr.bf16.gmra.mrb[0].mxu0 %v1507
  %v1543 = vpop.f32.mrb[0].mxu0
  %v1544 = vadd.f32 %v569, %v1543
  %v1545 = vpop.f32.mrb[0].mxu0
  %v1546 = vpop.f32.mrb[0].mxu0
  %v1547 = vpop.f32.mrb[0].mxu0
  %1548 = vdwg.mxu0
  %v1549 = vxor.u32 %v1544, 2147483648
  %v1550 = vmul.f32 %v1549, 1.442695
  %v1551 = vpow.pop %v1550
  %v1552 = vadd.f32 %v1551, 1.0
  %v1553 = vrcp.pop %v1552
  %v1554 = vmul.f32 1.0, %v1553
  %v1555 = vmul.f32 %v1554, 2.0
  %v1556 = vsub.f32 %v1555, 1.0
  %v1557 = vmul.f32 %v1554, %v1339
  %1559 = vrot.lane.b32.xlu0 %v1556, 64
  %v1560 = vpop.permute.xlu0 %1559
  %v1562 = vmul.f32 %v1554, %v1560
  %1564 = vrot.lane.b32.xlu0 %v1562, 32
  %v1565 = vpop.permute.xlu0 %1564
  %v1567 = vadd.f32 %v1557, %v1565
  %v1568 = vtanh.pop %v1567
  %1570 = vrot.lane.b32.xlu0 %v1568, 64
  %v1571 = vpop.permute.xlu0 %1570
  %v1573 = vmul.f32 %v1554, %v1571
  %v1574 = vpack.c.bf16 %v1418, %v1418
  %1576 = vrot.lane.b32.xlu0 %v1574, 32
  %v1577 = vpop.permute.xlu0 %1576
  %v1579 = vsel %vm75, %v1577, 0
  %1581 = vmatprep.subr.bf16.mxu0 0
  %1582 = vmatpush1.bf16.msra.mxu0 %v161
  %1583 = vmatprep.subr.bf16.mxu0 0
  %1584 = vmatpush1.bf16.msra.mxu0 %v162
  %1585 = vmatprep.subr.bf16.mxu0 0
  %1586 = vmatpush1.bf16.msra.mxu0 0
  %1587 = vmatprep.subr.bf16.mxu0 0
  %1588 = vmatpush1.bf16.msra.mxu0 0
  %1589 = vmatprep.subr.bf16.mxu0 0
  %1590 = vmatpush1.bf16.msra.mxu0 0
  %1591 = vmatprep.subr.bf16.mxu0 0
  %1592 = vmatpush1.bf16.msra.mxu0 0
  %1593 = vmatprep.subr.bf16.mxu0 0
  %1594 = vmatpush1.bf16.msra.mxu0 0
  %1595 = vmatprep.subr.bf16.mxu0 0
  %1596 = vmatpush1.bf16.msra.mxu0 0
  %1597 = vmatprep.subr.bf16.mxu0 0
  %1598 = vmatpush1.bf16.msra.mxu0 0
  %1599 = vmatprep.subr.bf16.mxu0 0
  %1600 = vmatpush1.bf16.msra.mxu0 0
  %1601 = vmatprep.subr.bf16.mxu0 0
  %1602 = vmatpush1.bf16.msra.mxu0 0
  %1603 = vmatprep.subr.bf16.mxu0 0
  %1604 = vmatpush1.bf16.msra.mxu0 0
  %1605 = vmatprep.subr.bf16.mxu0 0
  %1606 = vmatpush1.bf16.msra.mxu0 0
  %1607 = vmatprep.subr.bf16.mxu0 0
  %1608 = vmatpush1.bf16.msra.mxu0 0
  %1609 = vmatprep.subr.bf16.mxu0 0
  %1610 = vmatpush1.bf16.msra.mxu0 0
  %1611 = vmatprep.subr.bf16.mxu0 0
  %1612 = vmatpush1.bf16.msra.mxu0 0
  %1613 = vmatprep.mubr.bf16.mxu0 0
  %1614 = vmatmul.mubr.bf16.gmra.mrb[0].mxu0 %v1579
  %v1615 = vpop.f32.mrb[0].mxu0
  %v1616 = vadd.f32 0.0, %v1615
  %v1617 = vpop.f32.mrb[0].mxu0
  %v1618 = vpop.f32.mrb[0].mxu0
  %v1619 = vpop.f32.mrb[0].mxu0
  %1620 = vdwg.mxu0
  %v1621 = vadd.f32 %v150, %v1616
  %v1622 = vxor.u32 %v1621, 2147483648
  %v1623 = vmul.f32 %v1622, 1.442695
  %v1624 = vpow.pop %v1623
  %v1625 = vadd.f32 %v1624, 1.0
  %v1626 = vrcp.pop %v1625
  %v1627 = vmul.f32 1.0, %v1626
  %v1628 = vmul.f32 %v1627, 2.0
  %v1629 = vsub.f32 %v1628, 1.0
  %v1630 = vmul.f32 %v1627, %v1412
  %1632 = vrot.lane.b32.xlu0 %v1629, 64
  %v1633 = vpop.permute.xlu0 %1632
  %v1635 = vmul.f32 %v1627, %v1633
  %1637 = vrot.lane.b32.xlu0 %v1635, 32
  %v1638 = vpop.permute.xlu0 %1637
  %v1640 = vadd.f32 %v1630, %v1638
  %v1641 = vtanh.pop %v1640
  %1643 = vrot.lane.b32.xlu0 %v1641, 64
  %v1644 = vpop.permute.xlu0 %1643
  %v1646 = vmul.f32 %v1627, %v1644
  %1648 = vrot.lane.b32.xlu0 %v1418, 32
  %v1649 = vpop.permute.xlu0 %1648
  %1652 = vrot.lane.b32.xlu0 %v1496, 64
  %v1653 = vpop.permute.xlu0 %1652
  %v1655 = vsel %vm75, %v1649, %v1653
  %v1656 = vpack.c.bf16 %v1655, %v1655
  %v1658 = vsel %vm341, %v1656, 0
  %1660 = vmatprep.subr.bf16.mxu0 0
  %1661 = vmatpush1.bf16.msra.mxu0 %v333
  %1662 = vmatprep.subr.bf16.mxu0 0
  %1663 = vmatpush1.bf16.msra.mxu0 %v334
  %1664 = vmatprep.subr.bf16.mxu0 0
  %1665 = vmatpush1.bf16.msra.mxu0 %v335
  %1666 = vmatprep.subr.bf16.mxu0 0
  %1667 = vmatpush1.bf16.msra.mxu0 %v336
  %1668 = vmatprep.subr.bf16.mxu0 0
  %1669 = vmatpush1.bf16.msra.mxu0 0
  %1670 = vmatprep.subr.bf16.mxu0 0
  %1671 = vmatpush1.bf16.msra.mxu0 0
  %1672 = vmatprep.subr.bf16.mxu0 0
  %1673 = vmatpush1.bf16.msra.mxu0 0
  %1674 = vmatprep.subr.bf16.mxu0 0
  %1675 = vmatpush1.bf16.msra.mxu0 0
  %1676 = vmatprep.subr.bf16.mxu0 0
  %1677 = vmatpush1.bf16.msra.mxu0 0
  %1678 = vmatprep.subr.bf16.mxu0 0
  %1679 = vmatpush1.bf16.msra.mxu0 0
  %1680 = vmatprep.subr.bf16.mxu0 0
  %1681 = vmatpush1.bf16.msra.mxu0 0
  %1682 = vmatprep.subr.bf16.mxu0 0
  %1683 = vmatpush1.bf16.msra.mxu0 0
  %1684 = vmatprep.subr.bf16.mxu0 0
  %1685 = vmatpush1.bf16.msra.mxu0 0
  %1686 = vmatprep.subr.bf16.mxu0 0
  %1687 = vmatpush1.bf16.msra.mxu0 0
  %1688 = vmatprep.subr.bf16.mxu0 0
  %1689 = vmatpush1.bf16.msra.mxu0 0
  %1690 = vmatprep.subr.bf16.mxu0 0
  %1691 = vmatpush1.bf16.msra.mxu0 0
  %1692 = vmatprep.mubr.bf16.mxu0 0
  %1693 = vmatmul.mubr.bf16.gmra.mrb[0].mxu0 %v1658
  %v1694 = vpop.f32.mrb[0].mxu0
  %v1695 = vadd.f32 %v316, %v1694
  %v1696 = vpop.f32.mrb[0].mxu0
  %v1697 = vpop.f32.mrb[0].mxu0
  %v1698 = vpop.f32.mrb[0].mxu0
  %1699 = vdwg.mxu0
  %v1700 = vxor.u32 %v1695, 2147483648
  %v1701 = vmul.f32 %v1700, 1.442695
  %v1702 = vpow.pop %v1701
  %v1703 = vadd.f32 %v1702, 1.0
  %v1704 = vrcp.pop %v1703
  %v1705 = vmul.f32 1.0, %v1704
  %v1706 = vmul.f32 %v1705, 2.0
  %v1707 = vsub.f32 %v1706, 1.0
  %v1708 = vmul.f32 %v1705, %v1490
  %1710 = vrot.lane.b32.xlu0 %v1707, 64
  %v1711 = vpop.permute.xlu0 %1710
  %v1713 = vmul.f32 %v1705, %v1711
  %1715 = vrot.lane.b32.xlu0 %v1713, 32
  %v1716 = vpop.permute.xlu0 %1715
  %v1718 = vadd.f32 %v1708, %v1716
  %v1719 = vtanh.pop %v1718
  %1721 = vrot.lane.b32.xlu0 %v1719, 64
  %v1722 = vpop.permute.xlu0 %1721
  %v1724 = vmul.f32 %v1705, %v1722
  %1725 = vrot.lane.b32.xlu0 %v1496, 32
  %v1726 = vpop.permute.xlu0 %1725
  %1729 = vrot.lane.b32.xlu0 %v1573, 64
  %v1730 = vpop.permute.xlu0 %1729
  %v1732 = vsel %vm75, %v1726, %v1730
  %v1733 = vpack.c.bf16 %v1732, %v1732
  %v1735 = vsel %vm341, %v1733, 0
  %1737 = vmatprep.subr.bf16.mxu0 0
  %1738 = vmatpush1.bf16.msra.mxu0 %v586
  %1739 = vmatprep.subr.bf16.mxu0 0
  %1740 = vmatpush1.bf16.msra.mxu0 %v587
  %1741 = vmatprep.subr.bf16.mxu0 0
  %1742 = vmatpush1.bf16.msra.mxu0 %v588
  %1743 = vmatprep.subr.bf16.mxu0 0
  %1744 = vmatpush1.bf16.msra.mxu0 %v589
  %1745 = vmatprep.subr.bf16.mxu0 0
  %1746 = vmatpush1.bf16.msra.mxu0 0
  %1747 = vmatprep.subr.bf16.mxu0 0
  %1748 = vmatpush1.bf16.msra.mxu0 0
  %1749 = vmatprep.subr.bf16.mxu0 0
  %1750 = vmatpush1.bf16.msra.mxu0 0
  %1751 = vmatprep.subr.bf16.mxu0 0
  %1752 = vmatpush1.bf16.msra.mxu0 0
  %1753 = vmatprep.subr.bf16.mxu0 0
  %1754 = vmatpush1.bf16.msra.mxu0 0
  %1755 = vmatprep.subr.bf16.mxu0 0
  %1756 = vmatpush1.bf16.msra.mxu0 0
  %1757 = vmatprep.subr.bf16.mxu0 0
  %1758 = vmatpush1.bf16.msra.mxu0 0
  %1759 = vmatprep.subr.bf16.mxu0 0
  %1760 = vmatpush1.bf16.msra.mxu0 0
  %1761 = vmatprep.subr.bf16.mxu0 0
  %1762 = vmatpush1.bf16.msra.mxu0 0
  %1763 = vmatprep.subr.bf16.mxu0 0
  %1764 = vmatpush1.bf16.msra.mxu0 0
  %1765 = vmatprep.subr.bf16.mxu0 0
  %1766 = vmatpush1.bf16.msra.mxu0 0
  %1767 = vmatprep.subr.bf16.mxu0 0
  %1768 = vmatpush1.bf16.msra.mxu0 0
  %1769 = vmatprep.mubr.bf16.mxu0 0
  %1770 = vmatmul.mubr.bf16.gmra.mrb[0].mxu0 %v1735
  %v1771 = vpop.f32.mrb[0].mxu0
  %v1772 = vadd.f32 %v569, %v1771
  %v1773 = vpop.f32.mrb[0].mxu0
  %v1774 = vpop.f32.mrb[0].mxu0
  %v1775 = vpop.f32.mrb[0].mxu0
  %1776 = vdwg.mxu0
  %v1777 = vxor.u32 %v1772, 2147483648
  %v1778 = vmul.f32 %v1777, 1.442695
  %v1779 = vpow.pop %v1778
  %v1780 = vadd.f32 %v1779, 1.0
  %v1781 = vrcp.pop %v1780
  %v1782 = vmul.f32 1.0, %v1781
  %v1783 = vmul.f32 %v1782, 2.0
  %v1784 = vsub.f32 %v1783, 1.0
  %v1785 = vmul.f32 %v1782, %v1567
  %1787 = vrot.lane.b32.xlu0 %v1784, 64
  %v1788 = vpop.permute.xlu0 %1787
  %v1790 = vmul.f32 %v1782, %v1788
  %1792 = vrot.lane.b32.xlu0 %v1790, 32
  %v1793 = vpop.permute.xlu0 %1792
  %v1795 = vadd.f32 %v1785, %v1793
  %v1796 = vtanh.pop %v1795
  %1798 = vrot.lane.b32.xlu0 %v1796, 64
  %v1799 = vpop.permute.xlu0 %1798
  %v1801 = vmul.f32 %v1782, %v1799
  %1803 = vrot.lane.b32.xlu0 %v1646, 32
  %v1804 = vpop.permute.xlu0 %1803
  %1807 = vrot.lane.b32.xlu0 %v1724, 64
  %v1808 = vpop.permute.xlu0 %1807
  %v1810 = vsel %vm75, %v1804, %v1808
  %v1811 = vpack.c.bf16 %v1810, %v1810
  %v1813 = vsel %vm341, %v1811, 0
  %1815 = vmatprep.subr.bf16.mxu0 0
  %1816 = vmatpush1.bf16.msra.mxu0 %v333
  %1817 = vmatprep.subr.bf16.mxu0 0
  %1818 = vmatpush1.bf16.msra.mxu0 %v334
  %1819 = vmatprep.subr.bf16.mxu0 0
  %1820 = vmatpush1.bf16.msra.mxu0 %v335
  %1821 = vmatprep.subr.bf16.mxu0 0
  %1822 = vmatpush1.bf16.msra.mxu0 %v336
  %1823 = vmatprep.subr.bf16.mxu0 0
  %1824 = vmatpush1.bf16.msra.mxu0 0
  %1825 = vmatprep.subr.bf16.mxu0 0
  %1826 = vmatpush1.bf16.msra.mxu0 0
  %1827 = vmatprep.subr.bf16.mxu0 0
  %1828 = vmatpush1.bf16.msra.mxu0 0
  %1829 = vmatprep.subr.bf16.mxu0 0
  %1830 = vmatpush1.bf16.msra.mxu0 0
  %1831 = vmatprep.subr.bf16.mxu0 0
  %1832 = vmatpush1.bf16.msra.mxu0 0
  %1833 = vmatprep.subr.bf16.mxu0 0
  %1834 = vmatpush1.bf16.msra.mxu0 0
  %1835 = vmatprep.subr.bf16.mxu0 0
  %1836 = vmatpush1.bf16.msra.mxu0 0
  %1837 = vmatprep.subr.bf16.mxu0 0
  %1838 = vmatpush1.bf16.msra.mxu0 0
  %1839 = vmatprep.subr.bf16.mxu0 0
  %1840 = vmatpush1.bf16.msra.mxu0 0
  %1841 = vmatprep.subr.bf16.mxu0 0
  %1842 = vmatpush1.bf16.msra.mxu0 0
  %1843 = vmatprep.subr.bf16.mxu0 0
  %1844 = vmatpush1.bf16.msra.mxu0 0
  %1845 = vmatprep.subr.bf16.mxu0 0
  %1846 = vmatpush1.bf16.msra.mxu0 0
  %1847 = vmatprep.mubr.bf16.mxu0 0
  %1848 = vmatmul.mubr.bf16.gmra.mrb[0].mxu0 %v1813
  %v1849 = vpop.f32.mrb[0].mxu0
  %v1850 = vadd.f32 %v316, %v1849
  %v1851 = vpop.f32.mrb[0].mxu0
  %v1852 = vpop.f32.mrb[0].mxu0
  %v1853 = vpop.f32.mrb[0].mxu0
  %1854 = vdwg.mxu0
  %v1855 = vxor.u32 %v1850, 2147483648
  %v1856 = vmul.f32 %v1855, 1.442695
  %v1857 = vpow.pop %v1856
  %v1858 = vadd.f32 %v1857, 1.0
  %v1859 = vrcp.pop %v1858
  %v1860 = vmul.f32 1.0, %v1859
  %v1861 = vmul.f32 %v1860, 2.0
  %v1862 = vsub.f32 %v1861, 1.0
  %v1863 = vmul.f32 %v1860, %v1718
  %1865 = vrot.lane.b32.xlu0 %v1862, 64
  %v1866 = vpop.permute.xlu0 %1865
  %v1868 = vmul.f32 %v1860, %v1866
  %1870 = vrot.lane.b32.xlu0 %v1868, 32
  %v1871 = vpop.permute.xlu0 %1870
  %v1873 = vadd.f32 %v1863, %v1871
  %v1874 = vtanh.pop %v1873
  %1876 = vrot.lane.b32.xlu0 %v1874, 64
  %v1877 = vpop.permute.xlu0 %1876
  %v1879 = vmul.f32 %v1860, %v1877
  %1880 = vrot.lane.b32.xlu0 %v1724, 32
  %v1881 = vpop.permute.xlu0 %1880
  %1884 = vrot.lane.b32.xlu0 %v1801, 64
  %v1885 = vpop.permute.xlu0 %1884
  %v1887 = vsel %vm75, %v1881, %v1885
  %v1888 = vpack.c.bf16 %v1887, %v1887
  %v1890 = vsel %vm341, %v1888, 0
  %1892 = vmatprep.subr.bf16.mxu0 0
  %1893 = vmatpush1.bf16.msra.mxu0 %v586
  %1894 = vmatprep.subr.bf16.mxu0 0
  %1895 = vmatpush1.bf16.msra.mxu0 %v587
  %1896 = vmatprep.subr.bf16.mxu0 0
  %1897 = vmatpush1.bf16.msra.mxu0 %v588
  %1898 = vmatprep.subr.bf16.mxu0 0
  %1899 = vmatpush1.bf16.msra.mxu0 %v589
  %1900 = vmatprep.subr.bf16.mxu0 0
  %1901 = vmatpush1.bf16.msra.mxu0 0
  %1902 = vmatprep.subr.bf16.mxu0 0
  %1903 = vmatpush1.bf16.msra.mxu0 0
  %1904 = vmatprep.subr.bf16.mxu0 0
  %1905 = vmatpush1.bf16.msra.mxu0 0
  %1906 = vmatprep.subr.bf16.mxu0 0
  %1907 = vmatpush1.bf16.msra.mxu0 0
  %1908 = vmatprep.subr.bf16.mxu0 0
  %1909 = vmatpush1.bf16.msra.mxu0 0
  %1910 = vmatprep.subr.bf16.mxu0 0
  %1911 = vmatpush1.bf16.msra.mxu0 0
  %1912 = vmatprep.subr.bf16.mxu0 0
  %1913 = vmatpush1.bf16.msra.mxu0 0
  %1914 = vmatprep.subr.bf16.mxu0 0
  %1915 = vmatpush1.bf16.msra.mxu0 0
  %1916 = vmatprep.subr.bf16.mxu0 0
  %1917 = vmatpush1.bf16.msra.mxu0 0
  %1918 = vmatprep.subr.bf16.mxu0 0
  %1919 = vmatpush1.bf16.msra.mxu0 0
  %1920 = vmatprep.subr.bf16.mxu0 0
  %1921 = vmatpush1.bf16.msra.mxu0 0
  %1922 = vmatprep.subr.bf16.mxu0 0
  %1923 = vmatpush1.bf16.msra.mxu0 0
  %1924 = vmatprep.mubr.bf16.mxu0 0
  %1925 = vmatmul.mubr.bf16.gmra.mrb[0].mxu0 %v1890
  %v1926 = vpop.f32.mrb[0].mxu0
  %v1927 = vadd.f32 %v569, %v1926
  %v1928 = vpop.f32.mrb[0].mxu0
  %v1929 = vpop.f32.mrb[0].mxu0
  %v1930 = vpop.f32.mrb[0].mxu0
  %1931 = vdwg.mxu0
  %v1932 = vxor.u32 %v1927, 2147483648
  %v1933 = vmul.f32 %v1932, 1.442695
  %v1934 = vpow.pop %v1933
  %v1935 = vadd.f32 %v1934, 1.0
  %v1936 = vrcp.pop %v1935
  %v1937 = vmul.f32 1.0, %v1936
  %v1938 = vmul.f32 %v1937, 2.0
  %v1939 = vsub.f32 %v1938, 1.0
  %v1940 = vmul.f32 %v1937, %v1795
  %1942 = vrot.lane.b32.xlu0 %v1939, 64
  %v1943 = vpop.permute.xlu0 %1942
  %v1945 = vmul.f32 %v1937, %v1943
  %1947 = vrot.lane.b32.xlu0 %v1945, 32
  %v1948 = vpop.permute.xlu0 %1947
  %v1950 = vadd.f32 %v1940, %v1948
  %v1951 = vtanh.pop %v1950
  %1953 = vrot.lane.b32.xlu0 %v1951, 64
  %v1954 = vpop.permute.xlu0 %1953
  %v1956 = vmul.f32 %v1937, %v1954
  %1958 = vrot.lane.b32.xlu0 %v1879, 32
  %v1959 = vpop.permute.xlu0 %1958
  %1962 = vrot.lane.b32.xlu0 %v1956, 64
  %v1963 = vpop.permute.xlu0 %1962
  %v1965 = vsel %vm75, %v1959, %v1963
  %v1966 = vpack.c.bf16 %v1965, %v1965
  %v1968 = vsel %vm341, %v1966, 0
  %1970 = vmatprep.subr.bf16.mxu0 0
  %1971 = vmatpush1.bf16.msra.mxu0 %v586
  %1972 = vmatprep.subr.bf16.mxu0 0
  %1973 = vmatpush1.bf16.msra.mxu0 %v587
  %1974 = vmatprep.subr.bf16.mxu0 0
  %1975 = vmatpush1.bf16.msra.mxu0 %v588
  %1976 = vmatprep.subr.bf16.mxu0 0
  %1977 = vmatpush1.bf16.msra.mxu0 %v589
  %1978 = vmatprep.subr.bf16.mxu0 0
  %1979 = vmatpush1.bf16.msra.mxu0 0
  %1980 = vmatprep.subr.bf16.mxu0 0
  %1981 = vmatpush1.bf16.msra.mxu0 0
  %1982 = vmatprep.subr.bf16.mxu0 0
  %1983 = vmatpush1.bf16.msra.mxu0 0
  %1984 = vmatprep.subr.bf16.mxu0 0
  %1985 = vmatpush1.bf16.msra.mxu0 0
  %1986 = vmatprep.subr.bf16.mxu0 0
  %1987 = vmatpush1.bf16.msra.mxu0 0
  %1988 = vmatprep.subr.bf16.mxu0 0
  %1989 = vmatpush1.bf16.msra.mxu0 0
  %1990 = vmatprep.subr.bf16.mxu0 0
  %1991 = vmatpush1.bf16.msra.mxu0 0
  %1992 = vmatprep.subr.bf16.mxu0 0
  %1993 = vmatpush1.bf16.msra.mxu0 0
  %1994 = vmatprep.subr.bf16.mxu0 0
  %1995 = vmatpush1.bf16.msra.mxu0 0
  %1996 = vmatprep.subr.bf16.mxu0 0
  %1997 = vmatpush1.bf16.msra.mxu0 0
  %1998 = vmatprep.subr.bf16.mxu0 0
  %1999 = vmatpush1.bf16.msra.mxu0 0
  %2000 = vmatprep.subr.bf16.mxu0 0
  %2001 = vmatpush1.bf16.msra.mxu0 0
  %2002 = vmatprep.mubr.bf16.mxu0 0
  %2003 = vmatmul.mubr.bf16.gmra.mrb[0].mxu0 %v1968
  %v2004 = vpop.f32.mrb[0].mxu0
  %v2005 = vadd.f32 %v569, %v2004
  %v2006 = vpop.f32.mrb[0].mxu0
  %v2007 = vpop.f32.mrb[0].mxu0
  %v2008 = vpop.f32.mrb[0].mxu0
  %2009 = vdwg.mxu0
  %v2010 = vxor.u32 %v2005, 2147483648
  %v2011 = vmul.f32 %v2010, 1.442695
  %v2012 = vpow.pop %v2011
  %v2013 = vadd.f32 %v2012, 1.0
  %v2014 = vrcp.pop %v2013
  %v2015 = vmul.f32 1.0, %v2014
  %v2016 = vmul.f32 %v2015, 2.0
  %v2017 = vsub.f32 %v2016, 1.0
  %v2018 = vmul.f32 %v2015, %v1950
  %2020 = vrot.lane.b32.xlu0 %v2017, 64
  %v2021 = vpop.permute.xlu0 %2020
  %v2023 = vmul.f32 %v2015, %v2021
  %2025 = vrot.lane.b32.xlu0 %v2023, 32
  %v2026 = vpop.permute.xlu0 %2025
  %v2028 = vadd.f32 %v2018, %v2026
  %v2029 = vtanh.pop %v2028
  %2031 = vrot.lane.b32.xlu0 %v2029, 64
  %v2032 = vpop.permute.xlu0 %2031
  %v2034 = vmul.f32 %v2015, %v2032
  %v2035 = vld [vmem:[%s2] sm:$0xff]
  %v2036 = vld [vmem:[%s2 + $0x8] sm:$0xff]
  %v2037 = vld [vmem:[%s2 + $0x10] sm:$0xff]
  %v2038 = vld [vmem:[%s2 + $0x18] sm:$0xff]
  %v2039 = vld [vmem:[%s2 + $0x20] sm:$0x1]
  %v2040 = vld [vmem:[%s2 + $0x21] sm:$0x1]
  %v2041 = vld [vmem:[%s2 + $0x22] sm:$0x1]
  %v2042 = vpack.c.bf16 %v2034, %v2034
  %v2043 = vpack.c.bf16 %v2036, %v2035
  %v2044 = vpack.c.bf16 %v2038, %v2037
  %v2045 = vlaneseq
  %v2046 = vshrl.u32 %v2045, 7
  %v2047 = vsub.s32 0, %v2046
  %v2048 = vrot.slane %v2039, %v2047
  %2050 = vrot.lane.b32.xlu0 %v2042, 32
  %v2051 = vpop.permute.xlu0 %2050
  %v2053 = vsel %vm75, %v2051, 0
  %2055 = vmatprep.subr.bf16.mxu0 0
  %2056 = vmatpush1.bf16.msra.mxu0 %v2043
  %2057 = vmatprep.subr.bf16.mxu0 0
  %2058 = vmatpush1.bf16.msra.mxu0 %v2044
  %2059 = vmatprep.subr.bf16.mxu0 0
  %2060 = vmatpush1.bf16.msra.mxu0 0
  %2061 = vmatprep.subr.bf16.mxu0 0
  %2062 = vmatpush1.bf16.msra.mxu0 0
  %2063 = vmatprep.subr.bf16.mxu0 0
  %2064 = vmatpush1.bf16.msra.mxu0 0
  %2065 = vmatprep.subr.bf16.mxu0 0
  %2066 = vmatpush1.bf16.msra.mxu0 0
  %2067 = vmatprep.subr.bf16.mxu0 0
  %2068 = vmatpush1.bf16.msra.mxu0 0
  %2069 = vmatprep.subr.bf16.mxu0 0
  %2070 = vmatpush1.bf16.msra.mxu0 0
  %2071 = vmatprep.subr.bf16.mxu0 0
  %2072 = vmatpush1.bf16.msra.mxu0 0
  %2073 = vmatprep.subr.bf16.mxu0 0
  %2074 = vmatpush1.bf16.msra.mxu0 0
  %2075 = vmatprep.subr.bf16.mxu0 0
  %2076 = vmatpush1.bf16.msra.mxu0 0
  %2077 = vmatprep.subr.bf16.mxu0 0
  %2078 = vmatpush1.bf16.msra.mxu0 0
  %2079 = vmatprep.subr.bf16.mxu0 0
  %2080 = vmatpush1.bf16.msra.mxu0 0
  %2081 = vmatprep.subr.bf16.mxu0 0
  %2082 = vmatpush1.bf16.msra.mxu0 0
  %2083 = vmatprep.subr.bf16.mxu0 0
  %2084 = vmatpush1.bf16.msra.mxu0 0
  %2085 = vmatprep.subr.bf16.mxu0 0
  %2086 = vmatpush1.bf16.msra.mxu0 0
  %2087 = vmatprep.mubr.bf16.mxu0 0
  %2088 = vmatmul.mubr.bf16.gmra.mrb[0].mxu0 %v2053
  %v2089 = vpop.f32.mrb[0].mxu0
  %v2090 = vadd.f32 %v2048, %v2089
  %v2091 = vpop.f32.mrb[0].mxu0
  %v2092 = vpop.f32.mrb[0].mxu0
  %v2093 = vpop.f32.mrb[0].mxu0
  %2094 = vdwg.mxu0
  %v2095 = vmax.f32 %v2090, 0.0
  %v2096 = vlaneseq
  %v2097 = vshrl.u32 %v2096, 7
  %v2098 = vsub.s32 0, %v2097
  %v2099 = vrot.slane %v2040, %v2098
  %v2100 = vmul.f32 %v2095, %v2099
  %vm2101 = vcmask 130048
  %v2102 = vsel %vm2101, %v2100, 0.0
  %2103 = vadd.xlane.f32.xlu0 %v2102
  %v2104 = vpop.xlane.xlu0 %2103
  %v2105 = vlaneseq
  %v2106 = vshrl.u32 %v2105, 7
  %v2107 = vsub.s32 0, %v2106
  %v2108 = vrot.slane %v2041, %v2107
  %v2109 = vadd.f32 %v2104, %v2108
  %v2110 = vxor.u32 %v2109, 2147483648
  %v2111 = vmul.f32 %v2110, 1.442695
  %v2112 = vpow.pop %v2111
  %v2113 = vadd.f32 %v2112, 1.0
  %v2114 = vrcp.pop %v2113
  %v2115 = vmul.f32 1.0, %v2114
  %vm2116 = vcmask 7168
  %2117 = vst.msk [vmem:[%s3] sm:$0xff] %vm2116, %v2115
  // Predicated region
  $region14: #{tpu_custom_call.1} parent=0 // pred_check
    _
  $region15: #{tpu_custom_call.1} parent=0 // pred_check_branch
    %2119 = sbr.rel (0) target = $region17
  $region16: #{tpu_custom_call.1} parent=0 // pred_region
    _
  $region17: #{tpu_custom_call.1} parent=0 // pred_fallthru
    _
  // Predicated region
  $region18: #{tpu_custom_call.1} parent=0 // pred_check
    _
  $region19: #{tpu_custom_call.1} parent=0 // pred_check_branch
    %2121 = sbr.rel (0) target = $region21
  $region20: #{tpu_custom_call.1} parent=0 // pred_region
    _
  $region21: #{tpu_custom_call.1} parent=0 // pred_fallthru
    _

</llo_original>
